<compile_context>
chip_gen: v5e
topology: v5e:2x2
jax: 0.10.0
libtpu: 0.0.40
codegen_flags: <defaults>
</compile_context>

<pallas_src>
import functools

import jax
import jax.numpy as jnp
from jax.experimental import pallas as pl
from jax.experimental.pallas import tpu as pltpu

BN_EPS = 1e-5


# ----------------------------- Pallas kernel -----------------------------

def _cbam_kernel(x_ref, w1_ref, b1_ref, w2_ref, b2_ref, wr_ref, sy_ref, sashift_ref,
                 o_ref, *, H, W, C):
    """Fused CBAM (channel attention then spatial attention); one image per grid step."""
    x = x_ref[0]                                    # (H, W, C) f32
    xf = x.reshape(H * W, C)                        # layout-trivial collapse, C stays on lanes

    # ---------------- channel attention (CALayer) ----------------
    # Spatial average pool on the MXU (ones-row matmul, f32 accumulate) so the XLU only
    # has to do the max reduction.
    ones_hw = jnp.ones((1, H * W), jnp.float32)
    avg = jnp.dot(ones_hw, xf, preferred_element_type=jnp.float32) * (1.0 / (H * W))  # (1, C)
    mx = jnp.max(xf, axis=0, keepdims=True)                                            # (1, C)
    # Shared 1x1-conv MLP on both pooled vectors at once, bf16 operands / f32 accumulation.
    pools = jnp.concatenate([avg, mx], axis=0).astype(jnp.bfloat16)                    # (2, C)
    h1 = jnp.dot(pools, w1_ref[...], preferred_element_type=jnp.float32) + b1_ref[...]
    h1 = jnp.maximum(h1, 0.0)                                                          # ReLU
    att = jnp.dot(h1.astype(jnp.bfloat16), w2_ref[...],
                  preferred_element_type=jnp.float32) + b2_ref[...]
    ca = jax.nn.sigmoid(att[0:1, :] + att[1:2, :])                                     # (1, C)
    x_ca = x * ca                                                                      # (H, W, C)

    # ---------------- spatial attention (SALayer) ----------------
    max_c = jnp.max(x_ca, axis=-1)                                                     # (H, W)
    mean_c = jnp.mean(x_ca, axis=-1)                                                   # (H, W)
    # 3x3 conv (pad=1, channels [max, mean] -> 1, no bias) with the BN scale folded in,
    # expressed as small MXU matmuls against precomputed shift/weight matrices:
    #   conv = sum_ky  SY[ky] @ (max_c @ WR[ky,:W] + mean_c @ WR[ky,W:])
    acc = jnp.zeros((H, W), jnp.float32)
    for ky in range(3):
        wrk = wr_ref[ky]                                                               # (2W, W)
        t = (jnp.dot(max_c, wrk[:W, :], preferred_element_type=jnp.float32) +
             jnp.dot(mean_c, wrk[W:, :], preferred_element_type=jnp.float32))
        acc = acc + jnp.dot(sy_ref[ky], t, preferred_element_type=jnp.float32)
    sa = jax.nn.sigmoid(acc + sashift_ref[0])                                          # (H, W)

    o_ref[0] = x_ca * sa[:, :, None]


# ----------------------------- wrapper -----------------------------

def _sa_matmul_operands(sa_w, gamma, beta, mean, var, H, W):
    """Fold SALayer's 3x3 conv + BatchNorm2d(1) (inference) into matmul operands.

    Returns WR (3, 2W, W): per-ky column-shift matrices weighted by the conv taps (BN scale
    folded in); SY (3, H, H): per-ky row-shift matrices (zero padding folded in); and the
    BN shift as a (1,) scalar.
    """
    s = gamma / jnp.sqrt(var + BN_EPS)
    shift = beta - mean * s
    cx = [jnp.eye(W, k=1 - kx, dtype=jnp.float32) for kx in range(3)]   # (img @ cx)[., j] = img[., j+kx-1]
    wr = []
    for ky in range(3):
        top = sum(sa_w[ky, kx, 0] * cx[kx] for kx in range(3))          # 'max' input channel
        bot = sum(sa_w[ky, kx, 1] * cx[kx] for kx in range(3))          # 'mean' input channel
        wr.append(jnp.concatenate([top, bot], axis=0) * s)
    wr = jnp.stack(wr).astype(jnp.float32)                              # (3, 2W, W)
    sy = jnp.stack([jnp.eye(H, k=ky - 1, dtype=jnp.float32)             # (sy @ img)[i, .] = img[i+ky-1, .]
                    for ky in range(3)])                                # (3, H, H)
    return wr, sy, jnp.reshape(shift, (1,)).astype(jnp.float32)


def cbam_forward(params, x_nchw):
    """CBAM.forward (attention_type=None). Accepts / returns PyTorch-style NCHW float32."""
    x = jnp.transpose(x_nchw, (0, 2, 3, 1)).astype(jnp.float32)         # NCHW -> NHWC (C on lanes)
    N, H, W, C = x.shape
    Cr = params["ca_w1"].shape[1]

    wr, sy, sa_shift = _sa_matmul_operands(
        params["sa_w"], params["sa_gamma"], params["sa_beta"],
        params["sa_mean"], params["sa_var"], H, W)
    w1 = params["ca_w1"].astype(jnp.bfloat16)
    w2 = params["ca_w2"].astype(jnp.bfloat16)
    b1 = params["ca_b1"].reshape(1, Cr).astype(jnp.float32)
    b2 = params["ca_b2"].reshape(1, C).astype(jnp.float32)

    y = pl.pallas_call(
        functools.partial(_cbam_kernel, H=H, W=W, C=C),
        out_shape=jax.ShapeDtypeStruct((N, H, W, C), jnp.float32),
        grid=(N,),
        in_specs=[
            pl.BlockSpec((1, H, W, C), lambda b: (b, 0, 0, 0)),   # x
            pl.BlockSpec((C, Cr), lambda b: (0, 0)),              # CA MLP w1 (bf16)
            pl.BlockSpec((1, Cr), lambda b: (0, 0)),              # CA MLP b1
            pl.BlockSpec((Cr, C), lambda b: (0, 0)),              # CA MLP w2 (bf16)
            pl.BlockSpec((1, C), lambda b: (0, 0)),               # CA MLP b2
            pl.BlockSpec((3, 2 * W, W), lambda b: (0, 0, 0)),     # SA folded column/weight mats
            pl.BlockSpec((3, H, H), lambda b: (0, 0, 0)),         # SA row-shift mats
            pl.BlockSpec(memory_space=pltpu.MemorySpace.SMEM),    # SA BN shift scalar
        ],
        out_specs=pl.BlockSpec((1, H, W, C), lambda b: (b, 0, 0, 0)),
        compiler_params=pltpu.CompilerParams(dimension_semantics=("parallel",)),
    )(x, w1, b1, w2, b2, wr, sy, sa_shift)
    return jnp.transpose(y, (0, 3, 1, 2))                               # NHWC -> NCHW


# ----------------------------- parameters & pure-JAX reference -----------------------------

def init_cbam_params(key, in_channels, reduction=2):
    C, Cr = in_channels, in_channels // reduction
    ks = jax.random.split(key, 8)
    return {
        "ca_w1": jax.random.normal(ks[0], (C, Cr), jnp.float32) / jnp.sqrt(float(C)),
        "ca_b1": 0.01 * jax.random.normal(ks[1], (Cr,), jnp.float32),
        "ca_w2": jax.random.normal(ks[2], (Cr, C), jnp.float32) / jnp.sqrt(float(Cr)),
        "ca_b2": 0.01 * jax.random.normal(ks[3], (C,), jnp.float32),
        # 3x3 conv weights, (ky, kx, in-channel) with in-channel 0 = max, 1 = mean
        "sa_w": jax.random.normal(ks[4], (3, 3, 2), jnp.float32) / jnp.sqrt(18.0),
        "sa_gamma": 1.0 + 0.1 * jax.random.normal(ks[5], (), jnp.float32),
        "sa_beta": 0.1 * jax.random.normal(ks[6], (), jnp.float32),
        "sa_mean": 0.1 * jax.random.normal(ks[7], (), jnp.float32),
        "sa_var": jnp.float32(1.05),
    }


def cbam_reference(params, x):
    """Pure-JAX reference mirroring the PyTorch CBAM forward (inference-mode BN).
    CA-MLP operands are rounded through bf16 to mirror the kernel's MXU inputs."""
    N, C, H, W = x.shape
    w1 = params["ca_w1"].astype(jnp.bfloat16).astype(jnp.float32)
    w2 = params["ca_w2"].astype(jnp.bfloat16).astype(jnp.float32)

    def mlp(v):                                                   # (N, C)
        vq = v.astype(jnp.bfloat16).astype(jnp.float32)
        h = jnp.maximum(vq @ w1 + params["ca_b1"], 0.0)
        hq = h.astype(jnp.bfloat16).astype(jnp.float32)
        return hq @ w2 + params["ca_b2"]

    avg = jnp.mean(x, axis=(2, 3))
    mxp = jnp.max(x, axis=(2, 3))
    ca = jax.nn.sigmoid(mlp(avg) + mlp(mxp))                      # (N, C)
    x_ca = x * ca[:, :, None, None]

    max_c = jnp.max(x_ca, axis=1)
    mean_c = jnp.mean(x_ca, axis=1)
    comp = jnp.stack([max_c, mean_c], axis=1)                     # (N, 2, H, W)
    compp = jnp.pad(comp, ((0, 0), (0, 0), (1, 1), (1, 1)))
    conv = jnp.zeros((N, H, W), jnp.float32)
    for ky in range(3):
        for kx in range(3):
            conv = conv + jnp.einsum(
                "nchw,c->nhw", compp[:, :, ky:ky + H, kx:kx + W], params["sa_w"][ky, kx],
                precision=jax.lax.Precision.HIGHEST)
    s = params["sa_gamma"] / jnp.sqrt(params["sa_var"] + BN_EPS)
    t = params["sa_beta"] - params["sa_mean"] * s
    sa = jax.nn.sigmoid(conv * s + t)
    return x_ca * sa[:, None, :, :]


# ----------------------------- main -----------------------------

if __name__ == "__main__":
    key = jax.random.PRNGKey(0)
    kp, kx = jax.random.split(key)
    C = 128                                   # in_channels (lane-aligned); reduction=2 (CBAM default)
    params = init_cbam_params(kp, in_channels=C, reduction=2)
    x = jax.random.normal(kx, (2, C, 16, 16), jnp.float32)   # PyTorch-style NCHW input

    out = jax.jit(cbam_forward)(params, x)
    jax.block_until_ready(out)
    assert out.shape == x.shape and out.dtype == jnp.float32

    ref = cbam_reference(params, x)
    err = float(jnp.max(jnp.abs(out - ref)))
    assert err < 3e-2, f"mismatch vs reference: max abs err = {err}"
    print("KERNEL_OK")
</pallas_src>

<mosaic_0001>
module attributes {stable_mosaic.version = 11 : i64} {
  func.func @_cbam_kernel(%arg0: i32, %arg1: memref<1x16x16x128xf32, #tpu.memory_space<vmem>>, %arg2: memref<128x64xbf16, #tpu.memory_space<vmem>>, %arg3: memref<1x64xf32, #tpu.memory_space<vmem>>, %arg4: memref<64x128xbf16, #tpu.memory_space<vmem>>, %arg5: memref<1x128xf32, #tpu.memory_space<vmem>>, %arg6: memref<3x32x16xf32, #tpu.memory_space<vmem>>, %arg7: memref<3x16x16xf32, #tpu.memory_space<vmem>>, %arg8: memref<1xf32, #tpu.memory_space<smem>>, %arg9: memref<1x16x16x128xf32, #tpu.memory_space<vmem>>) attributes {dimension_semantics = [#tpu.dimension_semantics<parallel>], iteration_bounds = array<i64: 2>, scalar_prefetch = 0 : i64, scratch_operands = 0 : i64, tpu.core_type = #tpu.core_type<tc>, window_params = [{transform_indices = @transform_0, window_bounds = array<i64: 1, 16, 16, 128>}, {pipeline_mode = #tpu.pipeline_mode<synchronous>, transform_indices = @transform_1, window_bounds = array<i64: 128, 64>}, {pipeline_mode = #tpu.pipeline_mode<synchronous>, transform_indices = @transform_2, window_bounds = array<i64: 1, 64>}, {pipeline_mode = #tpu.pipeline_mode<synchronous>, transform_indices = @transform_3, window_bounds = array<i64: 64, 128>}, {pipeline_mode = #tpu.pipeline_mode<synchronous>, transform_indices = @transform_4, window_bounds = array<i64: 1, 128>}, {pipeline_mode = #tpu.pipeline_mode<synchronous>, transform_indices = @transform_5, window_bounds = array<i64: 3, 32, 16>}, {pipeline_mode = #tpu.pipeline_mode<synchronous>, transform_indices = @transform_6, window_bounds = array<i64: 3, 16, 16>}, {transform_indices = @transform_7, window_bounds = array<i64: 1>}, {transform_indices = @transform_8, window_bounds = array<i64: 1, 16, 16, 128>}]} {
    %c0 = arith.constant 0 : index
    %c0_0 = arith.constant 0 : index
    %c0_1 = arith.constant 0 : index
    %c0_2 = arith.constant 0 : index
    %0 = vector.load %arg1[%c0, %c0_0, %c0_1, %c0_2] : memref<1x16x16x128xf32, #tpu.memory_space<vmem>>, vector<1x16x16x128xf32>
    %1 = vector.shape_cast %0 : vector<1x16x16x128xf32> to vector<16x16x128xf32>
    %2 = vector.shape_cast %1 : vector<16x16x128xf32> to vector<256x128xf32>
    %cst = arith.constant 1.000000e+00 : f32
    %3 = vector.broadcast %cst : f32 to vector<1x256xf32>
    %cst_3 = arith.constant dense<0.000000e+00> : vector<1x128xf32>
    %4 = tpu.matmul %3, %2, %cst_3 {dimension_numbers = #tpu.dot_dimension_numbers<[1], [0], [0], [1], [0, 0, 1, 1], [], []>} : vector<1x256xf32>, vector<256x128xf32>, vector<1x128xf32> -> vector<1x128xf32>
    %cst_4 = arith.constant 3.906250e-03 : f32
    %5 = vector.broadcast %cst_4 : f32 to vector<1x128xf32>
    %6 = arith.mulf %4, %5 : vector<1x128xf32>
    %cst_5 = arith.constant dense<0xFF800000> : vector<128xf32>
    %7 = vector.multi_reduction <maximumf>, %2, %cst_5 [0] : vector<256x128xf32> to vector<128xf32>
    %8 = vector.shape_cast %7 : vector<128xf32> to vector<1x128xf32>
    %9 = tpu.concatenate %6, %8 in 0 : vector<1x128xf32>, vector<1x128xf32> -> vector<2x128xf32>
    %10 = arith.truncf %9 : vector<2x128xf32> to vector<2x128xbf16>
    %c0_6 = arith.constant 0 : index
    %c0_7 = arith.constant 0 : index
    %11 = vector.load %arg2[%c0_6, %c0_7] : memref<128x64xbf16, #tpu.memory_space<vmem>>, vector<128x64xbf16>
    %cst_8 = arith.constant dense<0.000000e+00> : vector<2x64xf32>
    %12 = tpu.matmul %10, %11, %cst_8 {dimension_numbers = #tpu.dot_dimension_numbers<[1], [0], [0], [1], [0, 0, 1, 1], [], []>} : vector<2x128xbf16>, vector<128x64xbf16>, vector<2x64xf32> -> vector<2x64xf32>
    %c0_9 = arith.constant 0 : index
    %c0_10 = arith.constant 0 : index
    %13 = vector.load %arg3[%c0_9, %c0_10] : memref<1x64xf32, #tpu.memory_space<vmem>>, vector<1x64xf32>
    %14 = vector.broadcast %13 : vector<1x64xf32> to vector<2x64xf32>
    %15 = arith.addf %12, %14 : vector<2x64xf32>
    %cst_11 = arith.constant 0.000000e+00 : f32
    %16 = vector.broadcast %cst_11 : f32 to vector<2x64xf32>
    %17 = arith.maximumf %15, %16 : vector<2x64xf32>
    %18 = arith.truncf %17 : vector<2x64xf32> to vector<2x64xbf16>
    %c0_12 = arith.constant 0 : index
    %c0_13 = arith.constant 0 : index
    %19 = vector.load %arg4[%c0_12, %c0_13] : memref<64x128xbf16, #tpu.memory_space<vmem>>, vector<64x128xbf16>
    %cst_14 = arith.constant dense<0.000000e+00> : vector<2x128xf32>
    %20 = tpu.matmul %18, %19, %cst_14 {dimension_numbers = #tpu.dot_dimension_numbers<[1], [0], [0], [1], [0, 0, 1, 1], [], []>} : vector<2x64xbf16>, vector<64x128xbf16>, vector<2x128xf32> -> vector<2x128xf32>
    %c0_15 = arith.constant 0 : index
    %c0_16 = arith.constant 0 : index
    %21 = vector.load %arg5[%c0_15, %c0_16] : memref<1x128xf32, #tpu.memory_space<vmem>>, vector<1x128xf32>
    %22 = vector.broadcast %21 : vector<1x128xf32> to vector<2x128xf32>
    %23 = arith.addf %20, %22 : vector<2x128xf32>
    %24 = vector.extract_strided_slice %23 {offsets = [0, 0], sizes = [1, 128], strides = [1, 1]} : vector<2x128xf32> to vector<1x128xf32>
    %25 = vector.extract_strided_slice %23 {offsets = [1, 0], sizes = [1, 128], strides = [1, 1]} : vector<2x128xf32> to vector<1x128xf32>
    %26 = arith.addf %24, %25 : vector<1x128xf32>
    %27 = arith.negf %26 : vector<1x128xf32>
    %28 = math.exp %27 : vector<1x128xf32>
    %cst_17 = arith.constant 1.000000e+00 : f32
    %29 = vector.broadcast %cst_17 : f32 to vector<1x128xf32>
    %30 = arith.addf %29, %28 : vector<1x128xf32>
    %31 = arith.divf %29, %30 : vector<1x128xf32>
    %32 = vector.shape_cast %31 : vector<1x128xf32> to vector<1x1x128xf32>
    %33 = vector.broadcast %32 : vector<1x1x128xf32> to vector<16x16x128xf32>
    %34 = arith.mulf %1, %33 : vector<16x16x128xf32>
    %cst_18 = arith.constant dense<0xFF800000> : vector<16x16xf32>
    %35 = vector.multi_reduction <maximumf>, %34, %cst_18 [2] : vector<16x16x128xf32> to vector<16x16xf32>
    %cst_19 = arith.constant dense<0.000000e+00> : vector<16x16xf32>
    %36 = vector.multi_reduction <add>, %34, %cst_19 [2] : vector<16x16x128xf32> to vector<16x16xf32>
    %cst_20 = arith.constant 1.280000e+02 : f32
    %37 = vector.broadcast %cst_20 : f32 to vector<16x16xf32>
    %38 = arith.divf %36, %37 : vector<16x16xf32>
    %cst_21 = arith.constant 0.000000e+00 : f32
    %39 = vector.broadcast %cst_21 : f32 to vector<16x16xf32>
    %c0_22 = arith.constant 0 : index
    %c0_23 = arith.constant 0 : index
    %c0_24 = arith.constant 0 : index
    %40 = vector.load %arg6[%c0_22, %c0_23, %c0_24] : memref<3x32x16xf32, #tpu.memory_space<vmem>>, vector<1x32x16xf32>
    %41 = vector.shape_cast %40 : vector<1x32x16xf32> to vector<32x16xf32>
    %42 = vector.extract_strided_slice %41 {offsets = [0, 0], sizes = [16, 16], strides = [1, 1]} : vector<32x16xf32> to vector<16x16xf32>
    %cst_25 = arith.constant dense<0.000000e+00> : vector<16x16xf32>
    %43 = tpu.matmul %35, %42, %cst_25 {dimension_numbers = #tpu.dot_dimension_numbers<[1], [0], [0], [1], [0, 0, 1, 1], [], []>} : vector<16x16xf32>, vector<16x16xf32>, vector<16x16xf32> -> vector<16x16xf32>
    %44 = vector.extract_strided_slice %41 {offsets = [16, 0], sizes = [16, 16], strides = [1, 1]} : vector<32x16xf32> to vector<16x16xf32>
    %cst_26 = arith.constant dense<0.000000e+00> : vector<16x16xf32>
    %45 = tpu.matmul %38, %44, %cst_26 {dimension_numbers = #tpu.dot_dimension_numbers<[1], [0], [0], [1], [0, 0, 1, 1], [], []>} : vector<16x16xf32>, vector<16x16xf32>, vector<16x16xf32> -> vector<16x16xf32>
    %46 = arith.addf %43, %45 : vector<16x16xf32>
    %c0_27 = arith.constant 0 : index
    %c0_28 = arith.constant 0 : index
    %c0_29 = arith.constant 0 : index
    %47 = vector.load %arg7[%c0_27, %c0_28, %c0_29] : memref<3x16x16xf32, #tpu.memory_space<vmem>>, vector<1x16x16xf32>
    %48 = vector.shape_cast %47 : vector<1x16x16xf32> to vector<16x16xf32>
    %cst_30 = arith.constant dense<0.000000e+00> : vector<16x16xf32>
    %49 = tpu.matmul %48, %46, %cst_30 {dimension_numbers = #tpu.dot_dimension_numbers<[1], [0], [0], [1], [0, 0, 1, 1], [], []>} : vector<16x16xf32>, vector<16x16xf32>, vector<16x16xf32> -> vector<16x16xf32>
    %50 = arith.addf %39, %49 : vector<16x16xf32>
    %c1 = arith.constant 1 : index
    %c0_31 = arith.constant 0 : index
    %c0_32 = arith.constant 0 : index
    %51 = vector.load %arg6[%c1, %c0_31, %c0_32] : memref<3x32x16xf32, #tpu.memory_space<vmem>>, vector<1x32x16xf32>
    %52 = vector.shape_cast %51 : vector<1x32x16xf32> to vector<32x16xf32>
    %53 = vector.extract_strided_slice %52 {offsets = [0, 0], sizes = [16, 16], strides = [1, 1]} : vector<32x16xf32> to vector<16x16xf32>
    %cst_33 = arith.constant dense<0.000000e+00> : vector<16x16xf32>
    %54 = tpu.matmul %35, %53, %cst_33 {dimension_numbers = #tpu.dot_dimension_numbers<[1], [0], [0], [1], [0, 0, 1, 1], [], []>} : vector<16x16xf32>, vector<16x16xf32>, vector<16x16xf32> -> vector<16x16xf32>
    %55 = vector.extract_strided_slice %52 {offsets = [16, 0], sizes = [16, 16], strides = [1, 1]} : vector<32x16xf32> to vector<16x16xf32>
    %cst_34 = arith.constant dense<0.000000e+00> : vector<16x16xf32>
    %56 = tpu.matmul %38, %55, %cst_34 {dimension_numbers = #tpu.dot_dimension_numbers<[1], [0], [0], [1], [0, 0, 1, 1], [], []>} : vector<16x16xf32>, vector<16x16xf32>, vector<16x16xf32> -> vector<16x16xf32>
    %57 = arith.addf %54, %56 : vector<16x16xf32>
    %c1_35 = arith.constant 1 : index
    %c0_36 = arith.constant 0 : index
    %c0_37 = arith.constant 0 : index
    %58 = vector.load %arg7[%c1_35, %c0_36, %c0_37] : memref<3x16x16xf32, #tpu.memory_space<vmem>>, vector<1x16x16xf32>
    %59 = vector.shape_cast %58 : vector<1x16x16xf32> to vector<16x16xf32>
    %cst_38 = arith.constant dense<0.000000e+00> : vector<16x16xf32>
    %60 = tpu.matmul %59, %57, %cst_38 {dimension_numbers = #tpu.dot_dimension_numbers<[1], [0], [0], [1], [0, 0, 1, 1], [], []>} : vector<16x16xf32>, vector<16x16xf32>, vector<16x16xf32> -> vector<16x16xf32>
    %61 = arith.addf %50, %60 : vector<16x16xf32>
    %c2 = arith.constant 2 : index
    %c0_39 = arith.constant 0 : index
    %c0_40 = arith.constant 0 : index
    %62 = vector.load %arg6[%c2, %c0_39, %c0_40] : memref<3x32x16xf32, #tpu.memory_space<vmem>>, vector<1x32x16xf32>
    %63 = vector.shape_cast %62 : vector<1x32x16xf32> to vector<32x16xf32>
    %64 = vector.extract_strided_slice %63 {offsets = [0, 0], sizes = [16, 16], strides = [1, 1]} : vector<32x16xf32> to vector<16x16xf32>
    %cst_41 = arith.constant dense<0.000000e+00> : vector<16x16xf32>
    %65 = tpu.matmul %35, %64, %cst_41 {dimension_numbers = #tpu.dot_dimension_numbers<[1], [0], [0], [1], [0, 0, 1, 1], [], []>} : vector<16x16xf32>, vector<16x16xf32>, vector<16x16xf32> -> vector<16x16xf32>
    %66 = vector.extract_strided_slice %63 {offsets = [16, 0], sizes = [16, 16], strides = [1, 1]} : vector<32x16xf32> to vector<16x16xf32>
    %cst_42 = arith.constant dense<0.000000e+00> : vector<16x16xf32>
    %67 = tpu.matmul %38, %66, %cst_42 {dimension_numbers = #tpu.dot_dimension_numbers<[1], [0], [0], [1], [0, 0, 1, 1], [], []>} : vector<16x16xf32>, vector<16x16xf32>, vector<16x16xf32> -> vector<16x16xf32>
    %68 = arith.addf %65, %67 : vector<16x16xf32>
    %c2_43 = arith.constant 2 : index
    %c0_44 = arith.constant 0 : index
    %c0_45 = arith.constant 0 : index
    %69 = vector.load %arg7[%c2_43, %c0_44, %c0_45] : memref<3x16x16xf32, #tpu.memory_space<vmem>>, vector<1x16x16xf32>
    %70 = vector.shape_cast %69 : vector<1x16x16xf32> to vector<16x16xf32>
    %cst_46 = arith.constant dense<0.000000e+00> : vector<16x16xf32>
    %71 = tpu.matmul %70, %68, %cst_46 {dimension_numbers = #tpu.dot_dimension_numbers<[1], [0], [0], [1], [0, 0, 1, 1], [], []>} : vector<16x16xf32>, vector<16x16xf32>, vector<16x16xf32> -> vector<16x16xf32>
    %72 = arith.addf %61, %71 : vector<16x16xf32>
    %c0_47 = arith.constant 0 : index
    %73 = memref.load %arg8[%c0_47] : memref<1xf32, #tpu.memory_space<smem>>
    %74 = vector.broadcast %73 : f32 to vector<16x16xf32>
    %75 = arith.addf %72, %74 : vector<16x16xf32>
    %76 = arith.negf %75 : vector<16x16xf32>
    %77 = math.exp %76 : vector<16x16xf32>
    %cst_48 = arith.constant 1.000000e+00 : f32
    %78 = vector.broadcast %cst_48 : f32 to vector<16x16xf32>
    %79 = arith.addf %78, %77 : vector<16x16xf32>
    %80 = arith.divf %78, %79 : vector<16x16xf32>
    %81 = vector.shape_cast %80 : vector<16x16xf32> to vector<16x16x1xf32>
    %82 = vector.broadcast %81 : vector<16x16x1xf32> to vector<16x16x128xf32>
    %83 = arith.mulf %34, %82 : vector<16x16x128xf32>
    %c0_49 = arith.constant 0 : index
    %c0_50 = arith.constant 0 : index
    %c0_51 = arith.constant 0 : index
    %c0_52 = arith.constant 0 : index
    %84 = vector.load %arg9[%c0_49, %c0_50, %c0_51, %c0_52] : memref<1x16x16x128xf32, #tpu.memory_space<vmem>>, vector<1x16x16x128xf32>
    %85 = vector.shape_cast %84 : vector<1x16x16x128xf32> to vector<16x16x128xf32>
    %86 = vector.shape_cast %83 : vector<16x16x128xf32> to vector<1x16x16x128xf32>
    tpu.vector_store %arg9[%c0_49, %c0_50, %c0_51, %c0_52], %86 {strides = array<i32>} : memref<1x16x16x128xf32, #tpu.memory_space<vmem>>, vector<1x16x16x128xf32>,
    return
  }
  func.func @transform_0(%arg0: i32) -> (i32, i32, i32, i32) {
    %c0_i32 = arith.constant 0 : i32
    %c0_i32_0 = arith.constant 0 : i32
    %c0_i32_1 = arith.constant 0 : i32
    %c0_i32_2 = arith.constant 0 : i32
    return %arg0, %c0_i32, %c0_i32_0, %c0_i32_1 : i32, i32, i32, i32
  }
  func.func @transform_1(%arg0: i32) -> (i32, i32) {
    %c0_i32 = arith.constant 0 : i32
    %c0_i32_0 = arith.constant 0 : i32
    %c0_i32_1 = arith.constant 0 : i32
    return %c0_i32, %c0_i32_0 : i32, i32
  }
  func.func @transform_2(%arg0: i32) -> (i32, i32) {
    %c0_i32 = arith.constant 0 : i32
    %c0_i32_0 = arith.constant 0 : i32
    %c0_i32_1 = arith.constant 0 : i32
    return %c0_i32, %c0_i32_0 : i32, i32
  }
  func.func @transform_3(%arg0: i32) -> (i32, i32) {
    %c0_i32 = arith.constant 0 : i32
    %c0_i32_0 = arith.constant 0 : i32
    %c0_i32_1 = arith.constant 0 : i32
    return %c0_i32, %c0_i32_0 : i32, i32
  }
  func.func @transform_4(%arg0: i32) -> (i32, i32) {
    %c0_i32 = arith.constant 0 : i32
    %c0_i32_0 = arith.constant 0 : i32
    %c0_i32_1 = arith.constant 0 : i32
    return %c0_i32, %c0_i32_0 : i32, i32
  }
  func.func @transform_5(%arg0: i32) -> (i32, i32, i32) {
    %c0_i32 = arith.constant 0 : i32
    %c0_i32_0 = arith.constant 0 : i32
    %c0_i32_1 = arith.constant 0 : i32
    %c0_i32_2 = arith.constant 0 : i32
    return %c0_i32, %c0_i32_0, %c0_i32_1 : i32, i32, i32
  }
  func.func @transform_6(%arg0: i32) -> (i32, i32, i32) {
    %c0_i32 = arith.constant 0 : i32
    %c0_i32_0 = arith.constant 0 : i32
    %c0_i32_1 = arith.constant 0 : i32
    %c0_i32_2 = arith.constant 0 : i32
    return %c0_i32, %c0_i32_0, %c0_i32_1 : i32, i32, i32
  }
  func.func @transform_7(%arg0: i32) -> i32 {
    %c0_i32 = arith.constant 0 : i32
    %c0_i32_0 = arith.constant 0 : i32
    return %c0_i32 : i32
  }
  func.func @transform_8(%arg0: i32) -> (i32, i32, i32, i32) {
    %c0_i32 = arith.constant 0 : i32
    %c0_i32_0 = arith.constant 0 : i32
    %c0_i32_1 = arith.constant 0 : i32
    %c0_i32_2 = arith.constant 0 : i32
    return %arg0, %c0_i32, %c0_i32_0, %c0_i32_1 : i32, i32, i32, i32
  }
}

</mosaic_0001>

<llo_original>
// kernel: cbam_forward.1
$region0: #{cbam_forward.1}
  #allocation0 [shape = 'u32[]', space=smem, size = 0x4, offset = 0x4, fixed_abs, tag = 'smem constant byte address 0x4 - core index']
  #allocation1 [shape = 'u32[72,128]{1,0:T(1,128)}', space=vmem, size = 0x9000, scoped, tag = 'internal scratch']
  #allocation2 [shape = 'f32[1]{0:T(128)S(6)}', space=smem, size = 0x200, scoped, tag = 'scoped memory for cbam_forward.1']
  %s0 = inlined_call_operand.vmem [shape: f32[2,16,16,128], index: 0, kind: input, shape index: {}]
  %s1 = inlined_call_operand.vmem [shape: bf16[128,64], index: 1, kind: input, shape index: {}]
  %s2 = inlined_call_operand.vmem [shape: f32[1,64], index: 2, kind: input, shape index: {}]
  %s3 = inlined_call_operand.vmem [shape: bf16[64,128], index: 3, kind: input, shape index: {}]
  %s4 = inlined_call_operand.vmem [shape: f32[1,128], index: 4, kind: input, shape index: {}]
  %s5 = inlined_call_operand.vmem [shape: f32[3,32,16], index: 5, kind: input, shape index: {}]
  %s6 = inlined_call_operand.vmem [shape: f32[3,16,16], index: 6, kind: input, shape index: {}]
  %s7 = inlined_call_operand.<no memory space> [shape: f32[1], index: 7, kind: input, shape index: {}]
  %s8 = inlined_call_operand.hbm [shape: f32[2,16,16,128], index: 8, kind: output, shape index: {}]
  %s9 = sld [smem:[#allocation0]]
  $region65: #{cbam_forward.1} parent=0
    _
  %s11 = ssub.s32 1, %s9
  %s12 = scalar_select 0, %s11, %s9
  %13 = sst [smem:[#allocation2]] %s7
  $region1: #{cbam_forward.1} parent=0
    #allocation3 [shape = 'u8[262144]{0}', space=vmem, size = 0x40000, scoped, tag = 'output window, operand 0']
    #allocation4 [shape = 's32[2]{0}', space=sflag, size = 0x8, scoped, tag = 'scoped memory for cbam_forward.1']
    %14 = vsyncpa [#allocation4], 0
    %s15 = scalar_lea.sflag [#allocation4], 1
    %16 = vsyncpa %s15, 0
    loop: start=0, step=1, limit=4
    $region2: #{cbam_forward.1} parent=1 // loop_pre_header
      _
    $region3: #{cbam_forward.1} parent=1 // loop_header
      %s18 = sphi 0, %s22
      %p19 = scmp.ge.s32.totalorder %s18, 4
      %s28 = sphi 0, %s30
      %s31 = sphi 0, %s28
      %s32 = sphi 0, %s31
      %s48 = sphi 0, %s32
      %s52 = sphi 0, %s52
      %s54 = sphi 0, %s52
      %s55 = sphi 0, %s54
      %s69 = sphi 0, %s55
      %s73 = sphi 0, %s73
      %s75 = sphi 0, %s73
      %s76 = sphi 0, %s75
      %s90 = sphi 0, %s76
      %s94 = sphi 0, %s94
      %s96 = sphi 0, %s94
      %s97 = sphi 0, %s96
      %s111 = sphi 0, %s97
      %s115 = sphi 0, %s115
      %s117 = sphi 0, %s115
      %s118 = sphi 0, %s117
      %s132 = sphi 0, %s118
      %s136 = sphi 0, %s136
      %s138 = sphi 0, %s136
      %s139 = sphi 0, %s138
      %s153 = sphi 0, %s139
      %s157 = sphi 0, %s157
      %s159 = sphi 0, %s157
      %s160 = sphi 0, %s159
      %s174 = sphi 0, %s160
      %s178 = sphi 0, %s178
      %s180 = sphi 0, %s178
      %s181 = sphi 0, %s180
      %s195 = sphi 0, %s181
      %s201 = sphi 0, %s203
      %s204 = sphi 0, %s201
      %s205 = sphi 0, %s204
      %s221 = sphi 0, %s205
    $region4: #{cbam_forward.1} parent=1 // loop_header_branch
      %21 = sbr.rel (%p19) target = $region8
    $region5: #{cbam_forward.1} parent=1 // loop_body
      %s23 = ssub.s32 %s18, 1
      %s24 = ssub.s32 %s18, 2
      %s25 = sadd.s32 %s18, 1
      %s26 = ssub.s32 %s18, %s25
      %p27 = scmp.eq.s32.totalorder %s26, 0
      %s29 = sadd.s32 %s28, 1
      %s30 = scalar_select %p27, %s28, %s29
      %p33 = pneg %p27
      %p34 = scmp.eq.s32.totalorder %s18, 1
      %p35 = por %p33, %p34
      %p36 = scmp.ne.s32.totalorder %s28, %s31
      %p37 = scmp.eq.s32.totalorder %s18, 0
      %p38 = por %p36, %p37
      %p39 = scmp.ne.s32.totalorder %s28, %s31
      %p40 = scmp.eq.s32.totalorder %s23, 1
      %p41 = por %p39, %p40
      %p42 = scmp.ne.s32.totalorder %s31, %s32
      %p43 = scmp.eq.s32.totalorder %s23, 0
      %p44 = por %p42, %p43
      %p45 = scmp.ne.s32.totalorder %s31, %s32
      %p46 = scmp.eq.s32.totalorder %s24, 1
      %p47 = por %p45, %p46
      %p49 = scmp.ne.s32.totalorder %s32, %s48
      %p50 = scmp.eq.s32.totalorder %s24, 0
      %p51 = por %p49, %p50
      %s53 = sadd.s32 %s52, 1
      %p56 = scmp.eq.s32.totalorder %s18, 1
      %p57 = scmp.ne.s32.totalorder %s52, %s54
      %p58 = scmp.eq.s32.totalorder %s18, 0
      %p59 = por %p57, %p58
      %p60 = scmp.ne.s32.totalorder %s52, %s54
      %p61 = scmp.eq.s32.totalorder %s23, 1
      %p62 = por %p60, %p61
      %p63 = scmp.ne.s32.totalorder %s54, %s55
      %p64 = scmp.eq.s32.totalorder %s23, 0
      %p65 = por %p63, %p64
      %p66 = scmp.ne.s32.totalorder %s54, %s55
      %p67 = scmp.eq.s32.totalorder %s24, 1
      %p68 = por %p66, %p67
      %p70 = scmp.ne.s32.totalorder %s55, %s69
      %p71 = scmp.eq.s32.totalorder %s24, 0
      %p72 = por %p70, %p71
      %s74 = sadd.s32 %s73, 1
      %p77 = scmp.eq.s32.totalorder %s18, 1
      %p78 = scmp.ne.s32.totalorder %s73, %s75
      %p79 = scmp.eq.s32.totalorder %s18, 0
      %p80 = por %p78, %p79
      %p81 = scmp.ne.s32.totalorder %s73, %s75
      %p82 = scmp.eq.s32.totalorder %s23, 1
      %p83 = por %p81, %p82
      %p84 = scmp.ne.s32.totalorder %s75, %s76
      %p85 = scmp.eq.s32.totalorder %s23, 0
      %p86 = por %p84, %p85
      %p87 = scmp.ne.s32.totalorder %s75, %s76
      %p88 = scmp.eq.s32.totalorder %s24, 1
      %p89 = por %p87, %p88
      %p91 = scmp.ne.s32.totalorder %s76, %s90
      %p92 = scmp.eq.s32.totalorder %s24, 0
      %p93 = por %p91, %p92
      %s95 = sadd.s32 %s94, 1
      %p98 = scmp.eq.s32.totalorder %s18, 1
      %p99 = scmp.ne.s32.totalorder %s94, %s96
      %p100 = scmp.eq.s32.totalorder %s18, 0
      %p101 = por %p99, %p100
      %p102 = scmp.ne.s32.totalorder %s94, %s96
      %p103 = scmp.eq.s32.totalorder %s23, 1
      %p104 = por %p102, %p103
      %p105 = scmp.ne.s32.totalorder %s96, %s97
      %p106 = scmp.eq.s32.totalorder %s23, 0
      %p107 = por %p105, %p106
      %p108 = scmp.ne.s32.totalorder %s96, %s97
      %p109 = scmp.eq.s32.totalorder %s24, 1
      %p110 = por %p108, %p109
      %p112 = scmp.ne.s32.totalorder %s97, %s111
      %p113 = scmp.eq.s32.totalorder %s24, 0
      %p114 = por %p112, %p113
      %s116 = sadd.s32 %s115, 1
      %p119 = scmp.eq.s32.totalorder %s18, 1
      %p120 = scmp.ne.s32.totalorder %s115, %s117
      %p121 = scmp.eq.s32.totalorder %s18, 0
      %p122 = por %p120, %p121
      %p123 = scmp.ne.s32.totalorder %s115, %s117
      %p124 = scmp.eq.s32.totalorder %s23, 1
      %p125 = por %p123, %p124
      %p126 = scmp.ne.s32.totalorder %s117, %s118
      %p127 = scmp.eq.s32.totalorder %s23, 0
      %p128 = por %p126, %p127
      %p129 = scmp.ne.s32.totalorder %s117, %s118
      %p130 = scmp.eq.s32.totalorder %s24, 1
      %p131 = por %p129, %p130
      %p133 = scmp.ne.s32.totalorder %s118, %s132
      %p134 = scmp.eq.s32.totalorder %s24, 0
      %p135 = por %p133, %p134
      %s137 = sadd.s32 %s136, 1
      %p140 = scmp.eq.s32.totalorder %s18, 1
      %p141 = scmp.ne.s32.totalorder %s136, %s138
      %p142 = scmp.eq.s32.totalorder %s18, 0
      %p143 = por %p141, %p142
      %p144 = scmp.ne.s32.totalorder %s136, %s138
      %p145 = scmp.eq.s32.totalorder %s23, 1
      %p146 = por %p144, %p145
      %p147 = scmp.ne.s32.totalorder %s138, %s139
      %p148 = scmp.eq.s32.totalorder %s23, 0
      %p149 = por %p147, %p148
      %p150 = scmp.ne.s32.totalorder %s138, %s139
      %p151 = scmp.eq.s32.totalorder %s24, 1
      %p152 = por %p150, %p151
      %p154 = scmp.ne.s32.totalorder %s139, %s153
      %p155 = scmp.eq.s32.totalorder %s24, 0
      %p156 = por %p154, %p155
      %s158 = sadd.s32 %s157, 1
      %p161 = scmp.eq.s32.totalorder %s18, 1
      %p162 = scmp.ne.s32.totalorder %s157, %s159
      %p163 = scmp.eq.s32.totalorder %s18, 0
      %p164 = por %p162, %p163
      %p165 = scmp.ne.s32.totalorder %s157, %s159
      %p166 = scmp.eq.s32.totalorder %s23, 1
      %p167 = por %p165, %p166
      %p168 = scmp.ne.s32.totalorder %s159, %s160
      %p169 = scmp.eq.s32.totalorder %s23, 0
      %p170 = por %p168, %p169
      %p171 = scmp.ne.s32.totalorder %s159, %s160
      %p172 = scmp.eq.s32.totalorder %s24, 1
      %p173 = por %p171, %p172
      %p175 = scmp.ne.s32.totalorder %s160, %s174
      %p176 = scmp.eq.s32.totalorder %s24, 0
      %p177 = por %p175, %p176
      %s179 = sadd.s32 %s178, 1
      %p182 = scmp.eq.s32.totalorder %s18, 1
      %p183 = scmp.ne.s32.totalorder %s178, %s180
      %p184 = scmp.eq.s32.totalorder %s18, 0
      %p185 = por %p183, %p184
      %p186 = scmp.ne.s32.totalorder %s178, %s180
      %p187 = scmp.eq.s32.totalorder %s23, 1
      %p188 = por %p186, %p187
      %p189 = scmp.ne.s32.totalorder %s180, %s181
      %p190 = scmp.eq.s32.totalorder %s23, 0
      %p191 = por %p189, %p190
      %p192 = scmp.ne.s32.totalorder %s180, %s181
      %p193 = scmp.eq.s32.totalorder %s24, 1
      %p194 = por %p192, %p193
      %p196 = scmp.ne.s32.totalorder %s181, %s195
      %p197 = scmp.eq.s32.totalorder %s24, 0
      %p198 = por %p196, %p197
      %s199 = ssub.s32 %s18, %s25
      %p200 = scmp.eq.s32.totalorder %s199, 0
      %s202 = sadd.s32 %s201, 1
      %s203 = scalar_select %p200, %s201, %s202
      %p206 = pneg %p200
      %p207 = scmp.eq.s32.totalorder %s18, 1
      %p208 = por %p206, %p207
      %p209 = scmp.ne.s32.totalorder %s201, %s204
      %p210 = scmp.eq.s32.totalorder %s18, 0
      %p211 = por %p209, %p210
      %p212 = scmp.ne.s32.totalorder %s201, %s204
      %p213 = scmp.eq.s32.totalorder %s23, 1
      %p214 = por %p212, %p213
      %p215 = scmp.ne.s32.totalorder %s204, %s205
      %p216 = scmp.eq.s32.totalorder %s23, 0
      %p217 = por %p215, %p216
      %p218 = scmp.ne.s32.totalorder %s204, %s205
      %p219 = scmp.eq.s32.totalorder %s24, 1
      %p220 = por %p218, %p219
      %p222 = scmp.ne.s32.totalorder %s205, %s221
      %p223 = scmp.eq.s32.totalorder %s24, 0
      %p224 = por %p222, %p223
      %p225 = scmp.le.s32.totalorder 1, %s18
      %p226 = scmp.lt.s32.totalorder %s18, 3
      %p227 = pnand %p225, %p226
      %p228 = pneg %p227
      // Predicated region
      $region9: #{cbam_forward.1} parent=5 // pred_check
        _
      $region10: #{cbam_forward.1} parent=5 // pred_check_branch
        %230 = sbr.rel (%p227) target = $region12
      $region11: #{cbam_forward.1} parent=5 // pred_region
        %s231 = ssub.s32 %s18, 1
        // Predicated region
        $region13: #{cbam_forward.1} parent=11 // pred_check
          %p232 = pneg %p65
        $region14: #{cbam_forward.1} parent=11 // pred_check_branch
          %234 = sbr.rel (%p232) target = $region16
        $region15: #{cbam_forward.1} parent=11 // pred_region
          _
        $region16: #{cbam_forward.1} parent=11 // pred_fallthru
          _
        // Predicated region
        $region17: #{cbam_forward.1} parent=11 // pred_check
          %p235 = pneg %p86
        $region18: #{cbam_forward.1} parent=11 // pred_check_branch
          %237 = sbr.rel (%p235) target = $region20
        $region19: #{cbam_forward.1} parent=11 // pred_region
          _
        $region20: #{cbam_forward.1} parent=11 // pred_fallthru
          _
        // Predicated region
        $region21: #{cbam_forward.1} parent=11 // pred_check
          %p238 = pneg %p107
        $region22: #{cbam_forward.1} parent=11 // pred_check_branch
          %240 = sbr.rel (%p238) target = $region24
        $region23: #{cbam_forward.1} parent=11 // pred_region
          _
        $region24: #{cbam_forward.1} parent=11 // pred_fallthru
          _
        // Predicated region
        $region25: #{cbam_forward.1} parent=11 // pred_check
          %p241 = pneg %p128
        $region26: #{cbam_forward.1} parent=11 // pred_check_branch
          %243 = sbr.rel (%p241) target = $region28
        $region27: #{cbam_forward.1} parent=11 // pred_region
          _
        $region28: #{cbam_forward.1} parent=11 // pred_fallthru
          _
        // Predicated region
        $region29: #{cbam_forward.1} parent=11 // pred_check
          %p244 = pneg %p149
        $region30: #{cbam_forward.1} parent=11 // pred_check_branch
          %246 = sbr.rel (%p244) target = $region32
        $region31: #{cbam_forward.1} parent=11 // pred_region
          _
        $region32: #{cbam_forward.1} parent=11 // pred_fallthru
          _
        // Predicated region
        $region33: #{cbam_forward.1} parent=11 // pred_check
          %p247 = pneg %p170
        $region34: #{cbam_forward.1} parent=11 // pred_check_branch
          %249 = sbr.rel (%p247) target = $region36
        $region35: #{cbam_forward.1} parent=11 // pred_region
          _
        $region36: #{cbam_forward.1} parent=11 // pred_fallthru
          _
        // Predicated region
        $region37: #{cbam_forward.1} parent=11 // pred_check
          %p250 = pneg %p191
        $region38: #{cbam_forward.1} parent=11 // pred_check_branch
          %252 = sbr.rel (%p250) target = $region40
        $region39: #{cbam_forward.1} parent=11 // pred_region
          _
        $region40: #{cbam_forward.1} parent=11 // pred_fallthru
          _
      $region12: #{cbam_forward.1} parent=5 // pred_fallthru
        _
      %p253 = scmp.lt.s32.totalorder %s18, 2
      // Predicated region
      $region41: #{cbam_forward.1} parent=5 // pred_check
        %p254 = pneg %p253
      $region42: #{cbam_forward.1} parent=5 // pred_check_branch
        %256 = sbr.rel (%p254) target = $region44
      $region43: #{cbam_forward.1} parent=5 // pred_region
        // Predicated region
        $region45: #{cbam_forward.1} parent=43 // pred_check
          %p257 = pneg %p38
        $region46: #{cbam_forward.1} parent=43 // pred_check_branch
          %259 = sbr.rel (%p257) target = $region48
        $region47: #{cbam_forward.1} parent=43 // pred_region
          %p260 = scmp.lt.s32.totalorder %s18, 1
          %s261 = scalar_select %p260, %s18, 1
          %s262 = smul.addr %s261, 32
          %s263 = smul.addr %s262, 8
          %s264 = scalar_lea.vmem %s0, %s263
        $region48: #{cbam_forward.1} parent=43 // pred_fallthru
          _
      $region44: #{cbam_forward.1} parent=5 // pred_fallthru
        _
      %p265 = scmp.le.s32.totalorder 1, %s18
      %p266 = scmp.lt.s32.totalorder %s18, 3
      %p267 = pnand %p265, %p266
      %p268 = pneg %p267
      // Predicated region
      $region49: #{cbam_forward.1} parent=5 // pred_check
        _
      $region50: #{cbam_forward.1} parent=5 // pred_check_branch
        %270 = sbr.rel (%p267) target = $region52
      $region51: #{cbam_forward.1} parent=5 // pred_region
        %s271 = ssub.s32 %s18, 1
        %p272 = scmp.lt.s32.totalorder %s23, 1
        %s273 = scalar_select %p272, %s23, 1
        %s274 = smul.addr %s273, 32
        %s275 = smul.addr %s274, 8
        %s276 = scalar_lea.vmem %s0, %s275
        %p277 = pneg %p44
        %p278 = pneg %p41
        %p279 = pneg %p65
        %p280 = pneg %p62
        %p281 = pneg %p86
        %p282 = pneg %p83
        %p283 = pneg %p107
        %p284 = pneg %p104
        %p285 = pneg %p128
        %p286 = pneg %p125
        %p287 = pneg %p149
        %p288 = pneg %p146
        %p289 = pneg %p170
        %p290 = pneg %p167
        %p291 = pneg %p191
        %p292 = pneg %p188
        %p293 = pneg %p217
        %p294 = pneg %p214
        %s295 = sand.u32 %s204, 1
        %s296 = scalar_lea.sflag [#allocation4], %s295
        %s297 = sand.u32 %s204, 1
        %s298 = smul.addr %s297, 256
        %s299 = scalar_lea.vmem [#allocation3], %s298
        %p300 = scmp.lt.s32.totalorder %s23, 1
        %s301 = scalar_select %p300, %s23, 1
        %s302 = smul.addr %s301, 32
        %s303 = smul.addr %s302, 8
        %s304 = scalar_lea.vmem %s0, %s303
        %v306 = vld [vmem:[%s304] sm:$0xff]
        %v307 = vld [vmem:[%s304 + $0x8] sm:$0xff]
        %v308 = vld [vmem:[%s304 + $0x10] sm:$0xff]
        %v309 = vld [vmem:[%s304 + $0x18] sm:$0xff]
        %v310 = vld [vmem:[%s304 + $0x20] sm:$0xff]
        %v311 = vld [vmem:[%s304 + $0x28] sm:$0xff]
        %v312 = vld [vmem:[%s304 + $0x30] sm:$0xff]
        %v313 = vld [vmem:[%s304 + $0x38] sm:$0xff]
        %v314 = vld [vmem:[%s304 + $0x40] sm:$0xff]
        %v315 = vld [vmem:[%s304 + $0x48] sm:$0xff]
        %v316 = vld [vmem:[%s304 + $0x50] sm:$0xff]
        %v317 = vld [vmem:[%s304 + $0x58] sm:$0xff]
        %v318 = vld [vmem:[%s304 + $0x60] sm:$0xff]
        %v319 = vld [vmem:[%s304 + $0x68] sm:$0xff]
        %v320 = vld [vmem:[%s304 + $0x70] sm:$0xff]
        %v321 = vld [vmem:[%s304 + $0x78] sm:$0xff]
        %v322 = vld [vmem:[%s304 + $0x80] sm:$0xff]
        %v323 = vld [vmem:[%s304 + $0x88] sm:$0xff]
        %v324 = vld [vmem:[%s304 + $0x90] sm:$0xff]
        %v325 = vld [vmem:[%s304 + $0x98] sm:$0xff]
        %v326 = vld [vmem:[%s304 + $0xa0] sm:$0xff]
        %v327 = vld [vmem:[%s304 + $0xa8] sm:$0xff]
        %v328 = vld [vmem:[%s304 + $0xb0] sm:$0xff]
        %v329 = vld [vmem:[%s304 + $0xb8] sm:$0xff]
        %v330 = vld [vmem:[%s304 + $0xc0] sm:$0xff]
        %v331 = vld [vmem:[%s304 + $0xc8] sm:$0xff]
        %v332 = vld [vmem:[%s304 + $0xd0] sm:$0xff]
        %v333 = vld [vmem:[%s304 + $0xd8] sm:$0xff]
        %v334 = vld [vmem:[%s304 + $0xe0] sm:$0xff]
        %v335 = vld [vmem:[%s304 + $0xe8] sm:$0xff]
        %v336 = vld [vmem:[%s304 + $0xf0] sm:$0xff]
        %v337 = vld [vmem:[%s304 + $0xf8] sm:$0xff]
        %338 = vmatpush.msra.mxu0 %v321
        %339 = vmatpush.msra.mxu0 %v320
        %340 = vmatpush.msra.mxu0 %v319
        %341 = vmatpush.msra.mxu0 %v318
        %342 = vmatpush.msra.mxu0 %v317
        %343 = vmatpush.msra.mxu0 %v316
        %344 = vmatpush.msra.mxu0 %v315
        %345 = vmatpush.msra.mxu0 %v314
        %346 = vmatpush.msra.mxu0 %v313
        %347 = vmatpush.msra.mxu0 %v312
        %348 = vmatpush.msra.mxu0 %v311
        %349 = vmatpush.msra.mxu0 %v310
        %350 = vmatpush.msra.mxu0 %v309
        %351 = vmatpush.msra.mxu0 %v308
        %352 = vmatpush.msra.mxu0 %v307
        %353 = vmatpush.msra.mxu0 %v306
        %354 = vmatmul.f32.gmra.mxu0 1.0
        %v355 = vpop.f32.mrf.mxu0
        %v356 = vadd.f32 0.0, %v355
        %357 = vdwg.mxu0
        %358 = vmatpush.msra.mxu0 %v337
        %359 = vmatpush.msra.mxu0 %v336
        %360 = vmatpush.msra.mxu0 %v335
        %361 = vmatpush.msra.mxu0 %v334
        %362 = vmatpush.msra.mxu0 %v333
        %363 = vmatpush.msra.mxu0 %v332
        %364 = vmatpush.msra.mxu0 %v331
        %365 = vmatpush.msra.mxu0 %v330
        %366 = vmatpush.msra.mxu0 %v329
        %367 = vmatpush.msra.mxu0 %v328
        %368 = vmatpush.msra.mxu0 %v327
        %369 = vmatpush.msra.mxu0 %v326
        %370 = vmatpush.msra.mxu0 %v325
        %371 = vmatpush.msra.mxu0 %v324
        %372 = vmatpush.msra.mxu0 %v323
        %373 = vmatpush.msra.mxu0 %v322
        %374 = vmatmul.f32.gmra.mxu0 1.0
        %v375 = vpop.f32.mrf.mxu0
        %v376 = vadd.f32 %v356, %v375
        %377 = vdwg.mxu0
        %v378 = vmul.f32 %v376, 0.00390625
        %v379 = vmax.f32 %v306, %v310
        %v380 = vmax.f32 %v307, %v311
        %v381 = vmax.f32 %v308, %v312
        %v382 = vmax.f32 %v309, %v313
        %v383 = vmax.f32 %v379, %v314
        %v384 = vmax.f32 %v380, %v315
        %v385 = vmax.f32 %v381, %v316
        %v386 = vmax.f32 %v382, %v317
        %v387 = vmax.f32 %v383, %v318
        %v388 = vmax.f32 %v384, %v319
        %v389 = vmax.f32 %v385, %v320
        %v390 = vmax.f32 %v386, %v321
        %v391 = vmax.f32 %v387, %v322
        %v392 = vmax.f32 %v388, %v323
        %v393 = vmax.f32 %v389, %v324
        %v394 = vmax.f32 %v390, %v325
        %v395 = vmax.f32 %v391, %v326
        %v396 = vmax.f32 %v392, %v327
        %v397 = vmax.f32 %v393, %v328
        %v398 = vmax.f32 %v394, %v329
        %v399 = vmax.f32 %v395, %v330
        %v400 = vmax.f32 %v396, %v331
        %v401 = vmax.f32 %v397, %v332
        %v402 = vmax.f32 %v398, %v333
        %v403 = vmax.f32 %v399, %v334
        %v404 = vmax.f32 %v400, %v335
        %v405 = vmax.f32 %v401, %v336
        %v406 = vmax.f32 %v402, %v337
        %v407 = vmax.f32 %v403, %v404
        %v408 = vmax.f32 %v405, %v406
        %v409 = vmax.f32 %v407, %v408
        %v410 = vrot.slane %v409, 4
        %v411 = vmax.f32 %v409, %v410
        %v412 = vrot.slane %v411, 2
        %v413 = vmax.f32 %v411, %v412
        %v414 = vrot.slane %v413, 1
        %v415 = vmax.f32 %v413, %v414
        %vm416 = vcmask 1040384
        %v417 = vsel %vm416, %v378, %v415
        %v418 = vpack.c.bf16 %v417, %v417
        %v419 = vld [vmem:[%s1] sm:$0xf]
        %v420 = vld [vmem:[%s1 + $0x4] sm:$0xf]
        %v421 = vld [vmem:[%s1 + $0x8] sm:$0xf]
        %v422 = vld [vmem:[%s1 + $0xc] sm:$0xf]
        %v423 = vld [vmem:[%s1 + $0x10] sm:$0xf]
        %v424 = vld [vmem:[%s1 + $0x14] sm:$0xf]
        %v425 = vld [vmem:[%s1 + $0x18] sm:$0xf]
        %v426 = vld [vmem:[%s1 + $0x1c] sm:$0xf]
        %v427 = vld [vmem:[%s1 + $0x20] sm:$0xf]
        %v428 = vld [vmem:[%s1 + $0x24] sm:$0xf]
        %v429 = vld [vmem:[%s1 + $0x28] sm:$0xf]
        %v430 = vld [vmem:[%s1 + $0x2c] sm:$0xf]
        %v431 = vld [vmem:[%s1 + $0x30] sm:$0xf]
        %v432 = vld [vmem:[%s1 + $0x34] sm:$0xf]
        %v433 = vld [vmem:[%s1 + $0x38] sm:$0xf]
        %v434 = vld [vmem:[%s1 + $0x3c] sm:$0xf]
        %v435 = vld [vmem:[%s2] sm:$0x1]
        %v437 = vperm.slane %v435, 0
        %v455 = vunpack.c.l.b16 %v419
        %v456 = vunpack.c.l.b16 %v420
        %v457 = vunpack.c.l.b16 %v421
        %v458 = vunpack.c.l.b16 %v422
        %v459 = vunpack.c.l.b16 %v423
        %v460 = vunpack.c.l.b16 %v424
        %v461 = vunpack.c.l.b16 %v425
        %v462 = vunpack.c.l.b16 %v426
        %v463 = vunpack.c.l.b16 %v427
        %v464 = vunpack.c.l.b16 %v428
        %v465 = vunpack.c.l.b16 %v429
        %v466 = vunpack.c.l.b16 %v430
        %v467 = vunpack.c.l.b16 %v431
        %v468 = vunpack.c.l.b16 %v432
        %v469 = vunpack.c.l.b16 %v433
        %v470 = vunpack.c.l.b16 %v434
        %v471 = vpack.c.b16 %v456, %v455
        %v472 = vpack.c.b16 %v458, %v457
        %v473 = vpack.c.b16 %v460, %v459
        %v474 = vpack.c.b16 %v462, %v461
        %v475 = vpack.c.b16 %v464, %v463
        %v476 = vpack.c.b16 %v466, %v465
        %v477 = vpack.c.b16 %v468, %v467
        %v478 = vpack.c.b16 %v470, %v469
        %487 = vmatpush.bf16.msra.mxu0 %v478
        %488 = vmatpush.bf16.msra.mxu0 %v477
        %489 = vmatpush.bf16.msra.mxu0 %v476
        %490 = vmatpush.bf16.msra.mxu0 %v475
        %491 = vmatpush.bf16.msra.mxu0 %v474
        %492 = vmatpush.bf16.msra.mxu0 %v473
        %493 = vmatpush.bf16.msra.mxu0 %v472
        %494 = vmatpush.bf16.msra.mxu0 %v471
        %495 = vmatmul.bf16.gmra.mxu0 %v418
        %v496 = vpop.f32.mrf.mxu0
        %v497 = vadd.f32 %v437, %v496
        %v498 = vpop.f32.mrf.mxu0
        %499 = vdwg.mxu0
        %v500 = vmax.f32 %v497, 0.0
        %v501 = vpack.c.bf16 %v500, %v500
        %v502 = vld [vmem:[%s3] sm:$0xf]
        %v503 = vld [vmem:[%s3 + $0x4] sm:$0xf]
        %v504 = vld [vmem:[%s3 + $0x8] sm:$0xf]
        %v505 = vld [vmem:[%s3 + $0xc] sm:$0xf]
        %v506 = vld [vmem:[%s3 + $0x10] sm:$0xf]
        %v507 = vld [vmem:[%s3 + $0x14] sm:$0xf]
        %v508 = vld [vmem:[%s3 + $0x18] sm:$0xf]
        %v509 = vld [vmem:[%s3 + $0x1c] sm:$0xf]
        %v510 = vld [vmem:[%s4] sm:$0x1]
        %v512 = vperm.slane %v510, 0
        %v522 = vunpack.c.l.b16 %v502
        %v523 = vunpack.c.l.b16 %v503
        %v524 = vunpack.c.l.b16 %v504
        %v525 = vunpack.c.l.b16 %v505
        %v526 = vunpack.c.l.b16 %v506
        %v527 = vunpack.c.l.b16 %v507
        %v528 = vunpack.c.l.b16 %v508
        %v529 = vunpack.c.l.b16 %v509
        %v530 = vpack.c.b16 %v523, %v522
        %v531 = vpack.c.b16 %v525, %v524
        %v532 = vpack.c.b16 %v527, %v526
        %v533 = vpack.c.b16 %v529, %v528
        %vm538 = vcmask 523264
        %v540 = vsel %vm538, %v501, 0
        %542 = vmatpush.bf16.msra.mxu0 0
        %543 = vmatpush.bf16.msra.mxu0 0
        %544 = vmatpush.bf16.msra.mxu0 0
        %545 = vmatpush.bf16.msra.mxu0 0
        %546 = vmatpush.bf16.msra.mxu0 %v533
        %547 = vmatpush.bf16.msra.mxu0 %v532
        %548 = vmatpush.bf16.msra.mxu0 %v531
        %549 = vmatpush.bf16.msra.mxu0 %v530
        %550 = vmatmul.bf16.gmra.mxu0 %v540
        %v551 = vpop.f32.mrf.mxu0
        %v552 = vadd.f32 %v512, %v551
        %v553 = vpop.f32.mrf.mxu0
        %554 = vdwg.mxu0
        %v556 = vrot.slane %v552, 1
        %v558 = vadd.f32 %v552, %v556
        %v559 = vxor.u32 %v558, 2147483648
        %v560 = vmul.f32 %v559, 1.442695
        %v561 = vpow.pop %v560
        %v562 = vadd.f32 %v561, 1.0
        %v563 = vrcp.pop %v562
        %v564 = vmul.f32 %v562, %v563
        %v565 = vsub.f32 1.0, %v564
        %v566 = vmul.f32 %v563, %v565
        %v567 = vadd.f32 %v563, %v566
        %vm568 = vweird.f32 %v562
        %vm569 = vweird.f32 %v563
        %vm570 = vmor %vm568, %vm569
        %v571 = vsel %vm570, %v563, %v567
        %v572 = vand.u32 2147483647, %v562
        %vm573 = vcmp.eq.f32.partialorder %v572, 8.507059e+37
        %v574 = vand.u32 %v562, 2147483648
        %v575 = vor.u32 1.1754944e-38, %v574
        %v576 = vsel %vm573, %v575, %v571
        %v577 = vmul.f32 1.0, %v576
        %v578 = vperm.slane %v577, 0
        %v579 = vmul.f32 %v306, %v578
        %v580 = vmul.f32 %v307, %v578
        %v581 = vmul.f32 %v308, %v578
        %v582 = vmul.f32 %v309, %v578
        %v583 = vmul.f32 %v310, %v578
        %v584 = vmul.f32 %v311, %v578
        %v585 = vmul.f32 %v312, %v578
        %v586 = vmul.f32 %v313, %v578
        %v587 = vmul.f32 %v314, %v578
        %v588 = vmul.f32 %v315, %v578
        %v589 = vmul.f32 %v316, %v578
        %v590 = vmul.f32 %v317, %v578
        %v591 = vmul.f32 %v318, %v578
        %v592 = vmul.f32 %v319, %v578
        %v593 = vmul.f32 %v320, %v578
        %v594 = vmul.f32 %v321, %v578
        %v595 = vmul.f32 %v322, %v578
        %v596 = vmul.f32 %v323, %v578
        %v597 = vmul.f32 %v324, %v578
        %v598 = vmul.f32 %v325, %v578
        %v599 = vmul.f32 %v326, %v578
        %v600 = vmul.f32 %v327, %v578
        %v601 = vmul.f32 %v328, %v578
        %v602 = vmul.f32 %v329, %v578
        %v603 = vmul.f32 %v330, %v578
        %v604 = vmul.f32 %v331, %v578
        %v605 = vmul.f32 %v332, %v578
        %v606 = vmul.f32 %v333, %v578
        %v607 = vmul.f32 %v334, %v578
        %v608 = vmul.f32 %v335, %v578
        %v609 = vmul.f32 %v336, %v578
        %v610 = vmul.f32 %v337, %v578
        %611 = vmax.xlane.f32.xlu0 %v579
        %v612 = vpop.xlane.xlu0 %611
        %613 = vmax.xlane.f32.xlu0 %v580
        %v614 = vpop.xlane.xlu0 %613
        %615 = vmax.xlane.f32.xlu0 %v581
        %v616 = vpop.xlane.xlu0 %615
        %617 = vmax.xlane.f32.xlu0 %v582
        %v618 = vpop.xlane.xlu0 %617
        %619 = vmax.xlane.f32.xlu0 %v583
        %v620 = vpop.xlane.xlu0 %619
        %621 = vmax.xlane.f32.xlu0 %v584
        %v622 = vpop.xlane.xlu0 %621
        %623 = vmax.xlane.f32.xlu0 %v585
        %v624 = vpop.xlane.xlu0 %623
        %625 = vmax.xlane.f32.xlu0 %v586
        %v626 = vpop.xlane.xlu0 %625
        %627 = vmax.xlane.f32.xlu0 %v587
        %v628 = vpop.xlane.xlu0 %627
        %629 = vmax.xlane.f32.xlu0 %v588
        %v630 = vpop.xlane.xlu0 %629
        %631 = vmax.xlane.f32.xlu0 %v589
        %v632 = vpop.xlane.xlu0 %631
        %633 = vmax.xlane.f32.xlu0 %v590
        %v634 = vpop.xlane.xlu0 %633
        %635 = vmax.xlane.f32.xlu0 %v591
        %v636 = vpop.xlane.xlu0 %635
        %637 = vmax.xlane.f32.xlu0 %v592
        %v638 = vpop.xlane.xlu0 %637
        %639 = vmax.xlane.f32.xlu0 %v593
        %v640 = vpop.xlane.xlu0 %639
        %641 = vmax.xlane.f32.xlu0 %v594
        %v642 = vpop.xlane.xlu0 %641
        %643 = vmax.xlane.f32.xlu0 %v595
        %v644 = vpop.xlane.xlu0 %643
        %645 = vmax.xlane.f32.xlu0 %v596
        %v646 = vpop.xlane.xlu0 %645
        %647 = vmax.xlane.f32.xlu0 %v597
        %v648 = vpop.xlane.xlu0 %647
        %649 = vmax.xlane.f32.xlu0 %v598
        %v650 = vpop.xlane.xlu0 %649
        %651 = vmax.xlane.f32.xlu0 %v599
        %v652 = vpop.xlane.xlu0 %651
        %653 = vmax.xlane.f32.xlu0 %v600
        %v654 = vpop.xlane.xlu0 %653
        %655 = vmax.xlane.f32.xlu0 %v601
        %v656 = vpop.xlane.xlu0 %655
        %657 = vmax.xlane.f32.xlu0 %v602
        %v658 = vpop.xlane.xlu0 %657
        %659 = vmax.xlane.f32.xlu0 %v603
        %v660 = vpop.xlane.xlu0 %659
        %661 = vmax.xlane.f32.xlu0 %v604
        %v662 = vpop.xlane.xlu0 %661
        %663 = vmax.xlane.f32.xlu0 %v605
        %v664 = vpop.xlane.xlu0 %663
        %665 = vmax.xlane.f32.xlu0 %v606
        %v666 = vpop.xlane.xlu0 %665
        %667 = vmax.xlane.f32.xlu0 %v607
        %v668 = vpop.xlane.xlu0 %667
        %669 = vmax.xlane.f32.xlu0 %v608
        %v670 = vpop.xlane.xlu0 %669
        %671 = vmax.xlane.f32.xlu0 %v609
        %v672 = vpop.xlane.xlu0 %671
        %673 = vmax.xlane.f32.xlu0 %v610
        %v674 = vpop.xlane.xlu0 %673
        %675 = vadd.xlane.f32.xlu0 %v579
        %v676 = vpop.xlane.xlu0 %675
        %677 = vadd.xlane.f32.xlu0 %v580
        %v678 = vpop.xlane.xlu0 %677
        %679 = vadd.xlane.f32.xlu0 %v581
        %v680 = vpop.xlane.xlu0 %679
        %681 = vadd.xlane.f32.xlu0 %v582
        %v682 = vpop.xlane.xlu0 %681
        %683 = vadd.xlane.f32.xlu0 %v583
        %v684 = vpop.xlane.xlu0 %683
        %685 = vadd.xlane.f32.xlu0 %v584
        %v686 = vpop.xlane.xlu0 %685
        %687 = vadd.xlane.f32.xlu0 %v585
        %v688 = vpop.xlane.xlu0 %687
        %689 = vadd.xlane.f32.xlu0 %v586
        %v690 = vpop.xlane.xlu0 %689
        %691 = vadd.xlane.f32.xlu0 %v587
        %v692 = vpop.xlane.xlu0 %691
        %693 = vadd.xlane.f32.xlu0 %v588
        %v694 = vpop.xlane.xlu0 %693
        %695 = vadd.xlane.f32.xlu0 %v589
        %v696 = vpop.xlane.xlu0 %695
        %697 = vadd.xlane.f32.xlu0 %v590
        %v698 = vpop.xlane.xlu0 %697
        %699 = vadd.xlane.f32.xlu0 %v591
        %v700 = vpop.xlane.xlu0 %699
        %701 = vadd.xlane.f32.xlu0 %v592
        %v702 = vpop.xlane.xlu0 %701
        %703 = vadd.xlane.f32.xlu0 %v593
        %v704 = vpop.xlane.xlu0 %703
        %705 = vadd.xlane.f32.xlu0 %v594
        %v706 = vpop.xlane.xlu0 %705
        %707 = vadd.xlane.f32.xlu0 %v595
        %v708 = vpop.xlane.xlu0 %707
        %709 = vadd.xlane.f32.xlu0 %v596
        %v710 = vpop.xlane.xlu0 %709
        %711 = vadd.xlane.f32.xlu0 %v597
        %v712 = vpop.xlane.xlu0 %711
        %713 = vadd.xlane.f32.xlu0 %v598
        %v714 = vpop.xlane.xlu0 %713
        %715 = vadd.xlane.f32.xlu0 %v599
        %v716 = vpop.xlane.xlu0 %715
        %717 = vadd.xlane.f32.xlu0 %v600
        %v718 = vpop.xlane.xlu0 %717
        %719 = vadd.xlane.f32.xlu0 %v601
        %v720 = vpop.xlane.xlu0 %719
        %721 = vadd.xlane.f32.xlu0 %v602
        %v722 = vpop.xlane.xlu0 %721
        %723 = vadd.xlane.f32.xlu0 %v603
        %v724 = vpop.xlane.xlu0 %723
        %725 = vadd.xlane.f32.xlu0 %v604
        %v726 = vpop.xlane.xlu0 %725
        %727 = vadd.xlane.f32.xlu0 %v605
        %v728 = vpop.xlane.xlu0 %727
        %729 = vadd.xlane.f32.xlu0 %v606
        %v730 = vpop.xlane.xlu0 %729
        %731 = vadd.xlane.f32.xlu0 %v607
        %v732 = vpop.xlane.xlu0 %731
        %733 = vadd.xlane.f32.xlu0 %v608
        %v734 = vpop.xlane.xlu0 %733
        %735 = vadd.xlane.f32.xlu0 %v609
        %v736 = vpop.xlane.xlu0 %735
        %737 = vadd.xlane.f32.xlu0 %v610
        %v738 = vpop.xlane.xlu0 %737
        %v739 = vrcp.pop 128.0
        %v740 = vmul.f32 128.0, %v739
        %v741 = vsub.f32 1.0, %v740
        %v742 = vmul.f32 %v739, %v741
        %v743 = vadd.f32 %v739, %v742
        %vm744 = vweird.f32 %v739
        %v745 = vsel %vm744, %v739, %v743
        %v746 = vmul.f32 %v676, %v745
        %v747 = vmul.f32 %v678, %v745
        %v748 = vmul.f32 %v680, %v745
        %v749 = vmul.f32 %v682, %v745
        %v750 = vmul.f32 %v684, %v745
        %v751 = vmul.f32 %v686, %v745
        %v752 = vmul.f32 %v688, %v745
        %v753 = vmul.f32 %v690, %v745
        %v754 = vmul.f32 %v692, %v745
        %v755 = vmul.f32 %v694, %v745
        %v756 = vmul.f32 %v696, %v745
        %v757 = vmul.f32 %v698, %v745
        %v758 = vmul.f32 %v700, %v745
        %v759 = vmul.f32 %v702, %v745
        %v760 = vmul.f32 %v704, %v745
        %v761 = vmul.f32 %v706, %v745
        %v762 = vmul.f32 %v708, %v745
        %v763 = vmul.f32 %v710, %v745
        %v764 = vmul.f32 %v712, %v745
        %v765 = vmul.f32 %v714, %v745
        %v766 = vmul.f32 %v716, %v745
        %v767 = vmul.f32 %v718, %v745
        %v768 = vmul.f32 %v720, %v745
        %v769 = vmul.f32 %v722, %v745
        %v770 = vmul.f32 %v724, %v745
        %v771 = vmul.f32 %v726, %v745
        %v772 = vmul.f32 %v728, %v745
        %v773 = vmul.f32 %v730, %v745
        %v774 = vmul.f32 %v732, %v745
        %v775 = vmul.f32 %v734, %v745
        %v776 = vmul.f32 %v736, %v745
        %v777 = vmul.f32 %v738, %v745
        %v778 = vld [vmem:[%s5] sm:$0xff]
        %v779 = vld [vmem:[%s5 + $0x8] sm:$0xff]
        %v780 = vld [vmem:[%s5 + $0x10] sm:$0xff]
        %v781 = vld [vmem:[%s5 + $0x18] sm:$0xff]
        %v814 = vlaneseq
        %v815 = vand.u32 %v814, 127
        %v816 = vperm.slane %v746, %v815
        %v817 = vadd.s32 %v815, 4294967288
        %v818 = vperm.slane %v747, %v817
        %vm819 = vcmask 130112
        %v820 = vsel %vm819, %v818, %v816
        %v821 = vperm.slane %v748, %v815
        %v822 = vperm.slane %v749, %v817
        %v823 = vsel %vm819, %v822, %v821
        %v824 = vperm.slane %v750, %v815
        %v825 = vperm.slane %v751, %v817
        %v826 = vsel %vm819, %v825, %v824
        %v827 = vperm.slane %v752, %v815
        %v828 = vperm.slane %v753, %v817
        %v829 = vsel %vm819, %v828, %v827
        %v830 = vperm.slane %v754, %v815
        %v831 = vperm.slane %v755, %v817
        %v832 = vsel %vm819, %v831, %v830
        %v833 = vperm.slane %v756, %v815
        %v834 = vperm.slane %v757, %v817
        %v835 = vsel %vm819, %v834, %v833
        %v836 = vperm.slane %v758, %v815
        %v837 = vperm.slane %v759, %v817
        %v838 = vsel %vm819, %v837, %v836
        %v839 = vperm.slane %v760, %v815
        %v840 = vperm.slane %v761, %v817
        %v841 = vsel %vm819, %v840, %v839
        %v842 = vperm.slane %v762, %v815
        %v843 = vperm.slane %v763, %v817
        %v844 = vsel %vm819, %v843, %v842
        %v845 = vperm.slane %v764, %v815
        %v846 = vperm.slane %v765, %v817
        %v847 = vsel %vm819, %v846, %v845
        %v848 = vperm.slane %v766, %v815
        %v849 = vperm.slane %v767, %v817
        %v850 = vsel %vm819, %v849, %v848
        %v851 = vperm.slane %v768, %v815
        %v852 = vperm.slane %v769, %v817
        %v853 = vsel %vm819, %v852, %v851
        %v854 = vperm.slane %v770, %v815
        %v855 = vperm.slane %v771, %v817
        %v856 = vsel %vm819, %v855, %v854
        %v857 = vperm.slane %v772, %v815
        %v858 = vperm.slane %v773, %v817
        %v859 = vsel %vm819, %v858, %v857
        %v860 = vperm.slane %v774, %v815
        %v861 = vperm.slane %v775, %v817
        %v862 = vsel %vm819, %v861, %v860
        %v863 = vperm.slane %v776, %v815
        %v864 = vperm.slane %v777, %v817
        %v865 = vsel %vm819, %v864, %v863
        %vm866 = vcmask 1041409
        %v867 = vsel %vm866, %v823, %v820
        %vm868 = vcmask 1042434
        %v869 = vsel %vm868, %v826, %v867
        %vm870 = vcmask 1043459
        %v871 = vsel %vm870, %v829, %v869
        %vm872 = vcmask 1044484
        %v873 = vsel %vm872, %v832, %v871
        %vm874 = vcmask 1045509
        %v875 = vsel %vm874, %v835, %v873
        %vm876 = vcmask 1046534
        %v877 = vsel %vm876, %v838, %v875
        %vm878 = vcmask 1047559
        %v879 = vsel %vm878, %v841, %v877
        %v880 = vsel %vm866, %v847, %v844
        %v881 = vsel %vm868, %v850, %v880
        %v882 = vsel %vm870, %v853, %v881
        %v883 = vsel %vm872, %v856, %v882
        %v884 = vsel %vm874, %v859, %v883
        %v885 = vsel %vm876, %v862, %v884
        %v886 = vsel %vm878, %v865, %v885
        %vm887 = vcmask 130048
        %v888 = vsel %vm887, %v879, 0
        %v890 = vsel %vm887, %v886, 0
        %892 = vmatpush.msra.mxu0 0.0
        %893 = vmatpush.msra.mxu0 0.0
        %894 = vmatpush.msra.mxu0 0.0
        %895 = vmatpush.msra.mxu0 0.0
        %896 = vmatpush.msra.mxu0 0.0
        %897 = vmatpush.msra.mxu0 0.0
        %898 = vmatpush.msra.mxu0 0.0
        %899 = vmatpush.msra.mxu0 0.0
        %900 = vmatpush.msra.mxu0 0.0
        %901 = vmatpush.msra.mxu0 0.0
        %902 = vmatpush.msra.mxu0 0.0
        %903 = vmatpush.msra.mxu0 0.0
        %904 = vmatpush.msra.mxu0 0.0
        %905 = vmatpush.msra.mxu0 0.0
        %906 = vmatpush.msra.mxu0 %v781
        %907 = vmatpush.msra.mxu0 %v780
        %908 = vmatmul.f32.gmra.mxu0 %v888
        %v909 = vpop.f32.mrf.mxu0
        %v910 = vadd.f32 0.0, %v909
        %911 = vmatmul.f32.gmra.mxu0 %v890
        %v912 = vpop.f32.mrf.mxu0
        %v913 = vadd.f32 0.0, %v912
        %914 = vdwg.mxu0
        %v947 = vperm.slane %v612, %v815
        %v948 = vperm.slane %v614, %v817
        %v949 = vsel %vm819, %v948, %v947
        %v950 = vperm.slane %v616, %v815
        %v951 = vperm.slane %v618, %v817
        %v952 = vsel %vm819, %v951, %v950
        %v953 = vperm.slane %v620, %v815
        %v954 = vperm.slane %v622, %v817
        %v955 = vsel %vm819, %v954, %v953
        %v956 = vperm.slane %v624, %v815
        %v957 = vperm.slane %v626, %v817
        %v958 = vsel %vm819, %v957, %v956
        %v959 = vperm.slane %v628, %v815
        %v960 = vperm.slane %v630, %v817
        %v961 = vsel %vm819, %v960, %v959
        %v962 = vperm.slane %v632, %v815
        %v963 = vperm.slane %v634, %v817
        %v964 = vsel %vm819, %v963, %v962
        %v965 = vperm.slane %v636, %v815
        %v966 = vperm.slane %v638, %v817
        %v967 = vsel %vm819, %v966, %v965
        %v968 = vperm.slane %v640, %v815
        %v969 = vperm.slane %v642, %v817
        %v970 = vsel %vm819, %v969, %v968
        %v971 = vperm.slane %v644, %v815
        %v972 = vperm.slane %v646, %v817
        %v973 = vsel %vm819, %v972, %v971
        %v974 = vperm.slane %v648, %v815
        %v975 = vperm.slane %v650, %v817
        %v976 = vsel %vm819, %v975, %v974
        %v977 = vperm.slane %v652, %v815
        %v978 = vperm.slane %v654, %v817
        %v979 = vsel %vm819, %v978, %v977
        %v980 = vperm.slane %v656, %v815
        %v981 = vperm.slane %v658, %v817
        %v982 = vsel %vm819, %v981, %v980
        %v983 = vperm.slane %v660, %v815
        %v984 = vperm.slane %v662, %v817
        %v985 = vsel %vm819, %v984, %v983
        %v986 = vperm.slane %v664, %v815
        %v987 = vperm.slane %v666, %v817
        %v988 = vsel %vm819, %v987, %v986
        %v989 = vperm.slane %v668, %v815
        %v990 = vperm.slane %v670, %v817
        %v991 = vsel %vm819, %v990, %v989
        %v992 = vperm.slane %v672, %v815
        %v993 = vperm.slane %v674, %v817
        %v994 = vsel %vm819, %v993, %v992
        %v995 = vsel %vm866, %v952, %v949
        %v996 = vsel %vm868, %v955, %v995
        %v997 = vsel %vm870, %v958, %v996
        %v998 = vsel %vm872, %v961, %v997
        %v999 = vsel %vm874, %v964, %v998
        %v1000 = vsel %vm876, %v967, %v999
        %v1001 = vsel %vm878, %v970, %v1000
        %v1002 = vsel %vm866, %v976, %v973
        %v1003 = vsel %vm868, %v979, %v1002
        %v1004 = vsel %vm870, %v982, %v1003
        %v1005 = vsel %vm872, %v985, %v1004
        %v1006 = vsel %vm874, %v988, %v1005
        %v1007 = vsel %vm876, %v991, %v1006
        %v1008 = vsel %vm878, %v994, %v1007
        %v1009 = vsel %vm887, %v1001, 0
        %v1011 = vsel %vm887, %v1008, 0
        %1013 = vmatpush.msra.mxu0 0.0
        %1014 = vmatpush.msra.mxu0 0.0
        %1015 = vmatpush.msra.mxu0 0.0
        %1016 = vmatpush.msra.mxu0 0.0
        %1017 = vmatpush.msra.mxu0 0.0
        %1018 = vmatpush.msra.mxu0 0.0
        %1019 = vmatpush.msra.mxu0 0.0
        %1020 = vmatpush.msra.mxu0 0.0
        %1021 = vmatpush.msra.mxu0 0.0
        %1022 = vmatpush.msra.mxu0 0.0
        %1023 = vmatpush.msra.mxu0 0.0
        %1024 = vmatpush.msra.mxu0 0.0
        %1025 = vmatpush.msra.mxu0 0.0
        %1026 = vmatpush.msra.mxu0 0.0
        %1027 = vmatpush.msra.mxu0 %v779
        %1028 = vmatpush.msra.mxu0 %v778
        %1029 = vmatmul.f32.gmra.mxu0 %v1009
        %v1030 = vpop.f32.mrf.mxu0
        %v1031 = vadd.f32 %v910, %v1030
        %1032 = vmatmul.f32.gmra.mxu0 %v1011
        %v1033 = vpop.f32.mrf.mxu0
        %v1034 = vadd.f32 %v913, %v1033
        %1035 = vdwg.mxu0
        %v1036 = vld [vmem:[%s6] sm:$0xff]
        %v1037 = vld [vmem:[%s6 + $0x8] sm:$0xff]
        %s1038 = scalar_lea.vmem %s5, 32
        %v1039 = vld [vmem:[%s1038] sm:$0xff]
        %v1040 = vld [vmem:[%s1038 + $0x8] sm:$0xff]
        %v1041 = vld [vmem:[%s1038 + $0x10] sm:$0xff]
        %v1042 = vld [vmem:[%s1038 + $0x18] sm:$0xff]
        %1043 = vmatpush.msra.mxu0 0.0
        %1044 = vmatpush.msra.mxu0 0.0
        %1045 = vmatpush.msra.mxu0 0.0
        %1046 = vmatpush.msra.mxu0 0.0
        %1047 = vmatpush.msra.mxu0 0.0
        %1048 = vmatpush.msra.mxu0 0.0
        %1049 = vmatpush.msra.mxu0 0.0
        %1050 = vmatpush.msra.mxu0 0.0
        %1051 = vmatpush.msra.mxu0 0.0
        %1052 = vmatpush.msra.mxu0 0.0
        %1053 = vmatpush.msra.mxu0 0.0
        %1054 = vmatpush.msra.mxu0 0.0
        %1055 = vmatpush.msra.mxu0 0.0
        %1056 = vmatpush.msra.mxu0 0.0
        %1057 = vmatpush.msra.mxu0 %v1042
        %1058 = vmatpush.msra.mxu0 %v1041
        %1059 = vmatmul.f32.gmra.mxu0 %v888
        %v1060 = vpop.f32.mrf.mxu0
        %v1061 = vadd.f32 0.0, %v1060
        %1062 = vmatmul.f32.gmra.mxu0 %v890
        %v1063 = vpop.f32.mrf.mxu0
        %v1064 = vadd.f32 0.0, %v1063
        %1065 = vdwg.mxu0
        %1066 = vmatpush.msra.mxu0 0.0
        %1067 = vmatpush.msra.mxu0 0.0
        %1068 = vmatpush.msra.mxu0 0.0
        %1069 = vmatpush.msra.mxu0 0.0
        %1070 = vmatpush.msra.mxu0 0.0
        %1071 = vmatpush.msra.mxu0 0.0
        %1072 = vmatpush.msra.mxu0 0.0
        %1073 = vmatpush.msra.mxu0 0.0
        %1074 = vmatpush.msra.mxu0 0.0
        %1075 = vmatpush.msra.mxu0 0.0
        %1076 = vmatpush.msra.mxu0 0.0
        %1077 = vmatpush.msra.mxu0 0.0
        %1078 = vmatpush.msra.mxu0 0.0
        %1079 = vmatpush.msra.mxu0 0.0
        %1080 = vmatpush.msra.mxu0 %v1040
        %1081 = vmatpush.msra.mxu0 %v1039
        %1082 = vmatmul.f32.gmra.mxu0 %v1009
        %v1083 = vpop.f32.mrf.mxu0
        %v1084 = vadd.f32 %v1061, %v1083
        %1085 = vmatmul.f32.gmra.mxu0 %v1011
        %v1086 = vpop.f32.mrf.mxu0
        %v1087 = vadd.f32 %v1064, %v1086
        %1088 = vdwg.mxu0
        %s1089 = scalar_lea.vmem %s6, 16
        %v1090 = vld [vmem:[%s1089] sm:$0xff]
        %v1091 = vld [vmem:[%s1089 + $0x8] sm:$0xff]
        %v1093 = vsel %vm887, %v1090, 0
        %v1096 = vsel %vm887, %v1091, 0
        %1098 = vmatpush.msra.mxu0 0.0
        %1099 = vmatpush.msra.mxu0 0.0
        %1100 = vmatpush.msra.mxu0 0.0
        %1101 = vmatpush.msra.mxu0 0.0
        %1102 = vmatpush.msra.mxu0 0.0
        %1103 = vmatpush.msra.mxu0 0.0
        %1104 = vmatpush.msra.mxu0 0.0
        %1105 = vmatpush.msra.mxu0 0.0
        %1106 = vmatpush.msra.mxu0 0.0
        %1107 = vmatpush.msra.mxu0 0.0
        %1108 = vmatpush.msra.mxu0 0.0
        %1109 = vmatpush.msra.mxu0 0.0
        %1110 = vmatpush.msra.mxu0 0.0
        %1111 = vmatpush.msra.mxu0 0.0
        %1112 = vmatpush.msra.mxu0 %v1087
        %1113 = vmatpush.msra.mxu0 %v1084
        %1114 = vmatmul.f32.gmra.mxu0 %v1093
        %v1115 = vpop.f32.mrf.mxu0
        %v1116 = vadd.f32 0.0, %v1115
        %1117 = vmatmul.f32.gmra.mxu0 %v1096
        %v1118 = vpop.f32.mrf.mxu0
        %v1119 = vadd.f32 0.0, %v1118
        %1120 = vdwg.mxu0
        %v1122 = vsel %vm887, %v1036, 0
        %v1125 = vsel %vm887, %v1037, 0
        %1127 = vmatpush.msra.mxu0 0.0
        %1128 = vmatpush.msra.mxu0 0.0
        %1129 = vmatpush.msra.mxu0 0.0
        %1130 = vmatpush.msra.mxu0 0.0
        %1131 = vmatpush.msra.mxu0 0.0
        %1132 = vmatpush.msra.mxu0 0.0
        %1133 = vmatpush.msra.mxu0 0.0
        %1134 = vmatpush.msra.mxu0 0.0
        %1135 = vmatpush.msra.mxu0 0.0
        %1136 = vmatpush.msra.mxu0 0.0
        %1137 = vmatpush.msra.mxu0 0.0
        %1138 = vmatpush.msra.mxu0 0.0
        %1139 = vmatpush.msra.mxu0 0.0
        %1140 = vmatpush.msra.mxu0 0.0
        %1141 = vmatpush.msra.mxu0 %v1034
        %1142 = vmatpush.msra.mxu0 %v1031
        %1143 = vmatmul.f32.gmra.mxu0 %v1122
        %v1144 = vpop.f32.mrf.mxu0
        %v1145 = vadd.f32 %v1116, %v1144
        %1146 = vmatmul.f32.gmra.mxu0 %v1125
        %v1147 = vpop.f32.mrf.mxu0
        %v1148 = vadd.f32 %v1119, %v1147
        %1149 = vdwg.mxu0
        %s1150 = scalar_lea.vmem %s5, 64
        %v1151 = vld [vmem:[%s1150] sm:$0xff]
        %v1152 = vld [vmem:[%s1150 + $0x8] sm:$0xff]
        %v1153 = vld [vmem:[%s1150 + $0x10] sm:$0xff]
        %v1154 = vld [vmem:[%s1150 + $0x18] sm:$0xff]
        %1155 = vmatpush.msra.mxu0 0.0
        %1156 = vmatpush.msra.mxu0 0.0
        %1157 = vmatpush.msra.mxu0 0.0
        %1158 = vmatpush.msra.mxu0 0.0
        %1159 = vmatpush.msra.mxu0 0.0
        %1160 = vmatpush.msra.mxu0 0.0
        %1161 = vmatpush.msra.mxu0 0.0
        %1162 = vmatpush.msra.mxu0 0.0
        %1163 = vmatpush.msra.mxu0 0.0
        %1164 = vmatpush.msra.mxu0 0.0
        %1165 = vmatpush.msra.mxu0 0.0
        %1166 = vmatpush.msra.mxu0 0.0
        %1167 = vmatpush.msra.mxu0 0.0
        %1168 = vmatpush.msra.mxu0 0.0
        %1169 = vmatpush.msra.mxu0 %v1154
        %1170 = vmatpush.msra.mxu0 %v1153
        %1171 = vmatmul.f32.gmra.mxu0 %v888
        %v1172 = vpop.f32.mrf.mxu0
        %v1173 = vadd.f32 0.0, %v1172
        %1174 = vmatmul.f32.gmra.mxu0 %v890
        %v1175 = vpop.f32.mrf.mxu0
        %v1176 = vadd.f32 0.0, %v1175
        %1177 = vdwg.mxu0
        %1178 = vmatpush.msra.mxu0 0.0
        %1179 = vmatpush.msra.mxu0 0.0
        %1180 = vmatpush.msra.mxu0 0.0
        %1181 = vmatpush.msra.mxu0 0.0
        %1182 = vmatpush.msra.mxu0 0.0
        %1183 = vmatpush.msra.mxu0 0.0
        %1184 = vmatpush.msra.mxu0 0.0
        %1185 = vmatpush.msra.mxu0 0.0
        %1186 = vmatpush.msra.mxu0 0.0
        %1187 = vmatpush.msra.mxu0 0.0
        %1188 = vmatpush.msra.mxu0 0.0
        %1189 = vmatpush.msra.mxu0 0.0
        %1190 = vmatpush.msra.mxu0 0.0
        %1191 = vmatpush.msra.mxu0 0.0
        %1192 = vmatpush.msra.mxu0 %v1152
        %1193 = vmatpush.msra.mxu0 %v1151
        %1194 = vmatmul.f32.gmra.mxu0 %v1009
        %v1195 = vpop.f32.mrf.mxu0
        %v1196 = vadd.f32 %v1173, %v1195
        %1197 = vmatmul.f32.gmra.mxu0 %v1011
        %v1198 = vpop.f32.mrf.mxu0
        %v1199 = vadd.f32 %v1176, %v1198
        %1200 = vdwg.mxu0
        %s1201 = scalar_lea.vmem %s6, 32
        %v1202 = vld [vmem:[%s1201] sm:$0xff]
        %v1203 = vld [vmem:[%s1201 + $0x8] sm:$0xff]
        %v1205 = vsel %vm887, %v1202, 0
        %v1208 = vsel %vm887, %v1203, 0
        %1210 = vmatpush.msra.mxu0 0.0
        %1211 = vmatpush.msra.mxu0 0.0
        %1212 = vmatpush.msra.mxu0 0.0
        %1213 = vmatpush.msra.mxu0 0.0
        %1214 = vmatpush.msra.mxu0 0.0
        %1215 = vmatpush.msra.mxu0 0.0
        %1216 = vmatpush.msra.mxu0 0.0
        %1217 = vmatpush.msra.mxu0 0.0
        %1218 = vmatpush.msra.mxu0 0.0
        %1219 = vmatpush.msra.mxu0 0.0
        %1220 = vmatpush.msra.mxu0 0.0
        %1221 = vmatpush.msra.mxu0 0.0
        %1222 = vmatpush.msra.mxu0 0.0
        %1223 = vmatpush.msra.mxu0 0.0
        %1224 = vmatpush.msra.mxu0 %v1199
        %1225 = vmatpush.msra.mxu0 %v1196
        %1226 = vmatmul.f32.gmra.mxu0 %v1205
        %v1227 = vpop.f32.mrf.mxu0
        %v1228 = vadd.f32 0.0, %v1227
        %1229 = vmatmul.f32.gmra.mxu0 %v1208
        %v1230 = vpop.f32.mrf.mxu0
        %v1231 = vadd.f32 0.0, %v1230
        %1232 = vdwg.mxu0
        %v1233 = vadd.f32 %v1145, %v1228
        %v1234 = vadd.f32 %v1148, %v1231
        %s1235 = sld [smem:[#allocation2]]
        %v1236 = vstv %s1235
        %v1237 = vadd.f32 %v1233, %v1236
        %v1238 = vadd.f32 %v1234, %v1236
        %v1239 = vxor.u32 %v1237, 2147483648
        %v1240 = vxor.u32 %v1238, 2147483648
        %v1241 = vmul.f32 %v1239, 1.442695
        %v1242 = vpow.pop %v1241
        %v1243 = vmul.f32 %v1240, 1.442695
        %v1244 = vpow.pop %v1243
        %v1245 = vadd.f32 %v1242, 1.0
        %v1246 = vadd.f32 %v1244, 1.0
        %v1247 = vrcp.pop %v1245
        %v1248 = vmul.f32 %v1245, %v1247
        %v1249 = vsub.f32 1.0, %v1248
        %v1250 = vmul.f32 %v1247, %v1249
        %v1251 = vadd.f32 %v1247, %v1250
        %vm1252 = vweird.f32 %v1245
        %vm1253 = vweird.f32 %v1247
        %vm1254 = vmor %vm1252, %vm1253
        %v1255 = vsel %vm1254, %v1247, %v1251
        %v1256 = vand.u32 2147483647, %v1245
        %vm1257 = vcmp.eq.f32.partialorder %v1256, 8.507059e+37
        %v1258 = vand.u32 %v1245, 2147483648
        %v1259 = vor.u32 1.1754944e-38, %v1258
        %v1260 = vsel %vm1257, %v1259, %v1255
        %v1261 = vmul.f32 1.0, %v1260
        %v1262 = vrcp.pop %v1246
        %v1263 = vmul.f32 %v1246, %v1262
        %v1264 = vsub.f32 1.0, %v1263
        %v1265 = vmul.f32 %v1262, %v1264
        %v1266 = vadd.f32 %v1262, %v1265
        %vm1267 = vweird.f32 %v1246
        %vm1268 = vweird.f32 %v1262
        %vm1269 = vmor %vm1267, %vm1268
        %v1270 = vsel %vm1269, %v1262, %v1266
        %v1271 = vand.u32 2147483647, %v1246
        %vm1272 = vcmp.eq.f32.partialorder %v1271, 8.507059e+37
        %v1273 = vand.u32 %v1246, 2147483648
        %v1274 = vor.u32 1.1754944e-38, %v1273
        %v1275 = vsel %vm1272, %v1274, %v1270
        %v1276 = vmul.f32 1.0, %v1275
        %v1277 = vperm.slane %v1261, 0
        %v1278 = vlaneseq
        %v1279 = vshrl.u32 %v1278, 7
        %1281 = vset.pattern.permute.xlu0 %v1279
        %1282 = vperm.xlu0 %1281, %v1277
        %v1283 = vpop.permute.xlu0 %1282
        %v1284 = vlaneseq
        %v1285 = vshrl.u32 %v1284, 7
        %v1286 = vadd.s32 %v1285, 8
        %1287 = vset.pattern.permute.xlu0 %v1286
        %1288 = vperm.xlu0 %1287, %v1277
        %v1289 = vpop.permute.xlu0 %1288
        %v1290 = vperm.slane %v1261, 1
        %v1291 = vlaneseq
        %v1292 = vshrl.u32 %v1291, 7
        %1294 = vset.pattern.permute.xlu0 %v1292
        %1295 = vperm.xlu0 %1294, %v1290
        %v1296 = vpop.permute.xlu0 %1295
        %v1297 = vlaneseq
        %v1298 = vshrl.u32 %v1297, 7
        %v1299 = vadd.s32 %v1298, 8
        %1300 = vset.pattern.permute.xlu0 %v1299
        %1301 = vperm.xlu0 %1300, %v1290
        %v1302 = vpop.permute.xlu0 %1301
        %v1303 = vperm.slane %v1261, 2
        %v1304 = vlaneseq
        %v1305 = vshrl.u32 %v1304, 7
        %1307 = vset.pattern.permute.xlu0 %v1305
        %1308 = vperm.xlu0 %1307, %v1303
        %v1309 = vpop.permute.xlu0 %1308
        %v1310 = vlaneseq
        %v1311 = vshrl.u32 %v1310, 7
        %v1312 = vadd.s32 %v1311, 8
        %1313 = vset.pattern.permute.xlu0 %v1312
        %1314 = vperm.xlu0 %1313, %v1303
        %v1315 = vpop.permute.xlu0 %1314
        %v1316 = vperm.slane %v1261, 3
        %v1317 = vlaneseq
        %v1318 = vshrl.u32 %v1317, 7
        %1320 = vset.pattern.permute.xlu0 %v1318
        %1321 = vperm.xlu0 %1320, %v1316
        %v1322 = vpop.permute.xlu0 %1321
        %v1323 = vlaneseq
        %v1324 = vshrl.u32 %v1323, 7
        %v1325 = vadd.s32 %v1324, 8
        %1326 = vset.pattern.permute.xlu0 %v1325
        %1327 = vperm.xlu0 %1326, %v1316
        %v1328 = vpop.permute.xlu0 %1327
        %v1329 = vperm.slane %v1261, 4
        %v1330 = vlaneseq
        %v1331 = vshrl.u32 %v1330, 7
        %1333 = vset.pattern.permute.xlu0 %v1331
        %1334 = vperm.xlu0 %1333, %v1329
        %v1335 = vpop.permute.xlu0 %1334
        %v1336 = vlaneseq
        %v1337 = vshrl.u32 %v1336, 7
        %v1338 = vadd.s32 %v1337, 8
        %1339 = vset.pattern.permute.xlu0 %v1338
        %1340 = vperm.xlu0 %1339, %v1329
        %v1341 = vpop.permute.xlu0 %1340
        %v1342 = vperm.slane %v1261, 5
        %v1343 = vlaneseq
        %v1344 = vshrl.u32 %v1343, 7
        %1346 = vset.pattern.permute.xlu0 %v1344
        %1347 = vperm.xlu0 %1346, %v1342
        %v1348 = vpop.permute.xlu0 %1347
        %v1349 = vlaneseq
        %v1350 = vshrl.u32 %v1349, 7
        %v1351 = vadd.s32 %v1350, 8
        %1352 = vset.pattern.permute.xlu0 %v1351
        %1353 = vperm.xlu0 %1352, %v1342
        %v1354 = vpop.permute.xlu0 %1353
        %v1355 = vperm.slane %v1261, 6
        %v1356 = vlaneseq
        %v1357 = vshrl.u32 %v1356, 7
        %1359 = vset.pattern.permute.xlu0 %v1357
        %1360 = vperm.xlu0 %1359, %v1355
        %v1361 = vpop.permute.xlu0 %1360
        %v1362 = vlaneseq
        %v1363 = vshrl.u32 %v1362, 7
        %v1364 = vadd.s32 %v1363, 8
        %1365 = vset.pattern.permute.xlu0 %v1364
        %1366 = vperm.xlu0 %1365, %v1355
        %v1367 = vpop.permute.xlu0 %1366
        %v1368 = vperm.slane %v1261, 7
        %v1369 = vlaneseq
        %v1370 = vshrl.u32 %v1369, 7
        %1372 = vset.pattern.permute.xlu0 %v1370
        %1373 = vperm.xlu0 %1372, %v1368
        %v1374 = vpop.permute.xlu0 %1373
        %v1375 = vlaneseq
        %v1376 = vshrl.u32 %v1375, 7
        %v1377 = vadd.s32 %v1376, 8
        %1378 = vset.pattern.permute.xlu0 %v1377
        %1379 = vperm.xlu0 %1378, %v1368
        %v1380 = vpop.permute.xlu0 %1379
        %v1381 = vperm.slane %v1276, 0
        %v1382 = vlaneseq
        %v1383 = vshrl.u32 %v1382, 7
        %1385 = vset.pattern.permute.xlu0 %v1383
        %1386 = vperm.xlu0 %1385, %v1381
        %v1387 = vpop.permute.xlu0 %1386
        %v1388 = vlaneseq
        %v1389 = vshrl.u32 %v1388, 7
        %v1390 = vadd.s32 %v1389, 8
        %1391 = vset.pattern.permute.xlu0 %v1390
        %1392 = vperm.xlu0 %1391, %v1381
        %v1393 = vpop.permute.xlu0 %1392
        %v1394 = vperm.slane %v1276, 1
        %v1395 = vlaneseq
        %v1396 = vshrl.u32 %v1395, 7
        %1398 = vset.pattern.permute.xlu0 %v1396
        %1399 = vperm.xlu0 %1398, %v1394
        %v1400 = vpop.permute.xlu0 %1399
        %v1401 = vlaneseq
        %v1402 = vshrl.u32 %v1401, 7
        %v1403 = vadd.s32 %v1402, 8
        %1404 = vset.pattern.permute.xlu0 %v1403
        %1405 = vperm.xlu0 %1404, %v1394
        %v1406 = vpop.permute.xlu0 %1405
        %v1407 = vperm.slane %v1276, 2
        %v1408 = vlaneseq
        %v1409 = vshrl.u32 %v1408, 7
        %1411 = vset.pattern.permute.xlu0 %v1409
        %1412 = vperm.xlu0 %1411, %v1407
        %v1413 = vpop.permute.xlu0 %1412
        %v1414 = vlaneseq
        %v1415 = vshrl.u32 %v1414, 7
        %v1416 = vadd.s32 %v1415, 8
        %1417 = vset.pattern.permute.xlu0 %v1416
        %1418 = vperm.xlu0 %1417, %v1407
        %v1419 = vpop.permute.xlu0 %1418
        %v1420 = vperm.slane %v1276, 3
        %v1421 = vlaneseq
        %v1422 = vshrl.u32 %v1421, 7
        %1424 = vset.pattern.permute.xlu0 %v1422
        %1425 = vperm.xlu0 %1424, %v1420
        %v1426 = vpop.permute.xlu0 %1425
        %v1427 = vlaneseq
        %v1428 = vshrl.u32 %v1427, 7
        %v1429 = vadd.s32 %v1428, 8
        %1430 = vset.pattern.permute.xlu0 %v1429
        %1431 = vperm.xlu0 %1430, %v1420
        %v1432 = vpop.permute.xlu0 %1431
        %v1433 = vperm.slane %v1276, 4
        %v1434 = vlaneseq
        %v1435 = vshrl.u32 %v1434, 7
        %1437 = vset.pattern.permute.xlu0 %v1435
        %1438 = vperm.xlu0 %1437, %v1433
        %v1439 = vpop.permute.xlu0 %1438
        %v1440 = vlaneseq
        %v1441 = vshrl.u32 %v1440, 7
        %v1442 = vadd.s32 %v1441, 8
        %1443 = vset.pattern.permute.xlu0 %v1442
        %1444 = vperm.xlu0 %1443, %v1433
        %v1445 = vpop.permute.xlu0 %1444
        %v1446 = vperm.slane %v1276, 5
        %v1447 = vlaneseq
        %v1448 = vshrl.u32 %v1447, 7
        %1450 = vset.pattern.permute.xlu0 %v1448
        %1451 = vperm.xlu0 %1450, %v1446
        %v1452 = vpop.permute.xlu0 %1451
        %v1453 = vlaneseq
        %v1454 = vshrl.u32 %v1453, 7
        %v1455 = vadd.s32 %v1454, 8
        %1456 = vset.pattern.permute.xlu0 %v1455
        %1457 = vperm.xlu0 %1456, %v1446
        %v1458 = vpop.permute.xlu0 %1457
        %v1459 = vperm.slane %v1276, 6
        %v1460 = vlaneseq
        %v1461 = vshrl.u32 %v1460, 7
        %1463 = vset.pattern.permute.xlu0 %v1461
        %1464 = vperm.xlu0 %1463, %v1459
        %v1465 = vpop.permute.xlu0 %1464
        %v1466 = vlaneseq
        %v1467 = vshrl.u32 %v1466, 7
        %v1468 = vadd.s32 %v1467, 8
        %1469 = vset.pattern.permute.xlu0 %v1468
        %1470 = vperm.xlu0 %1469, %v1459
        %v1471 = vpop.permute.xlu0 %1470
        %v1472 = vperm.slane %v1276, 7
        %v1473 = vlaneseq
        %v1474 = vshrl.u32 %v1473, 7
        %1476 = vset.pattern.permute.xlu0 %v1474
        %1477 = vperm.xlu0 %1476, %v1472
        %v1478 = vpop.permute.xlu0 %1477
        %v1479 = vlaneseq
        %v1480 = vshrl.u32 %v1479, 7
        %v1481 = vadd.s32 %v1480, 8
        %1482 = vset.pattern.permute.xlu0 %v1481
        %1483 = vperm.xlu0 %1482, %v1472
        %v1484 = vpop.permute.xlu0 %1483
        %v1485 = vmul.f32 %v579, %v1283
        %v1486 = vmul.f32 %v580, %v1289
        %v1487 = vmul.f32 %v581, %v1296
        %v1488 = vmul.f32 %v582, %v1302
        %v1489 = vmul.f32 %v583, %v1309
        %v1490 = vmul.f32 %v584, %v1315
        %v1491 = vmul.f32 %v585, %v1322
        %v1492 = vmul.f32 %v586, %v1328
        %v1493 = vmul.f32 %v587, %v1335
        %v1494 = vmul.f32 %v588, %v1341
        %v1495 = vmul.f32 %v589, %v1348
        %v1496 = vmul.f32 %v590, %v1354
        %v1497 = vmul.f32 %v591, %v1361
        %v1498 = vmul.f32 %v592, %v1367
        %v1499 = vmul.f32 %v593, %v1374
        %v1500 = vmul.f32 %v594, %v1380
        %v1501 = vmul.f32 %v595, %v1387
        %v1502 = vmul.f32 %v596, %v1393
        %v1503 = vmul.f32 %v597, %v1400
        %v1504 = vmul.f32 %v598, %v1406
        %v1505 = vmul.f32 %v599, %v1413
        %v1506 = vmul.f32 %v600, %v1419
        %v1507 = vmul.f32 %v601, %v1426
        %v1508 = vmul.f32 %v602, %v1432
        %v1509 = vmul.f32 %v603, %v1439
        %v1510 = vmul.f32 %v604, %v1445
        %v1511 = vmul.f32 %v605, %v1452
        %v1512 = vmul.f32 %v606, %v1458
        %v1513 = vmul.f32 %v607, %v1465
        %v1514 = vmul.f32 %v608, %v1471
        %v1515 = vmul.f32 %v609, %v1478
        %v1516 = vmul.f32 %v610, %v1484
        %1517 = vst [vmem:[%s299] sm:$0xff] %v1485
        %1518 = vst [vmem:[%s299 + $0x8] sm:$0xff] %v1486
        %1519 = vst [vmem:[%s299 + $0x10] sm:$0xff] %v1487
        %1520 = vst [vmem:[%s299 + $0x18] sm:$0xff] %v1488
        %1521 = vst [vmem:[%s299 + $0x20] sm:$0xff] %v1489
        %1522 = vst [vmem:[%s299 + $0x28] sm:$0xff] %v1490
        %1523 = vst [vmem:[%s299 + $0x30] sm:$0xff] %v1491
        %1524 = vst [vmem:[%s299 + $0x38] sm:$0xff] %v1492
        %1525 = vst [vmem:[%s299 + $0x40] sm:$0xff] %v1493
        %1526 = vst [vmem:[%s299 + $0x48] sm:$0xff] %v1494
        %1527 = vst [vmem:[%s299 + $0x50] sm:$0xff] %v1495
        %1528 = vst [vmem:[%s299 + $0x58] sm:$0xff] %v1496
        %1529 = vst [vmem:[%s299 + $0x60] sm:$0xff] %v1497
        %1530 = vst [vmem:[%s299 + $0x68] sm:$0xff] %v1498
        %1531 = vst [vmem:[%s299 + $0x70] sm:$0xff] %v1499
        %1532 = vst [vmem:[%s299 + $0x78] sm:$0xff] %v1500
        %1533 = vst [vmem:[%s299 + $0x80] sm:$0xff] %v1501
        %1534 = vst [vmem:[%s299 + $0x88] sm:$0xff] %v1502
        %1535 = vst [vmem:[%s299 + $0x90] sm:$0xff] %v1503
        %1536 = vst [vmem:[%s299 + $0x98] sm:$0xff] %v1504
        %1537 = vst [vmem:[%s299 + $0xa0] sm:$0xff] %v1505
        %1538 = vst [vmem:[%s299 + $0xa8] sm:$0xff] %v1506
        %1539 = vst [vmem:[%s299 + $0xb0] sm:$0xff] %v1507
        %1540 = vst [vmem:[%s299 + $0xb8] sm:$0xff] %v1508
        %1541 = vst [vmem:[%s299 + $0xc0] sm:$0xff] %v1509
        %1542 = vst [vmem:[%s299 + $0xc8] sm:$0xff] %v1510
        %1543 = vst [vmem:[%s299 + $0xd0] sm:$0xff] %v1511
        %1544 = vst [vmem:[%s299 + $0xd8] sm:$0xff] %v1512
        %1545 = vst [vmem:[%s299 + $0xe0] sm:$0xff] %v1513
        %1546 = vst [vmem:[%s299 + $0xe8] sm:$0xff] %v1514
        %1547 = vst [vmem:[%s299 + $0xf0] sm:$0xff] %v1515
        %1548 = vst [vmem:[%s299 + $0xf8] sm:$0xff] %v1516
        %s1549 = sand.u32 %s204, 1
        %s1550 = scalar_lea.sflag [#allocation4], %s1549
        %s1551 = sand.u32 %s204, 1
        %s1552 = smul.addr %s1551, 256
        %s1553 = scalar_lea.vmem [#allocation3], %s1552
        // Predicated region
        $region53: #{cbam_forward.1} parent=51 // pred_check
          %p1554 = pneg %p214
        $region54: #{cbam_forward.1} parent=51 // pred_check_branch
          %1556 = sbr.rel (%p1554) target = $region56
        $region55: #{cbam_forward.1} parent=51 // pred_region
          %1558 = vsyncadd %s1550, 0
          %s1559 = smul.addr %s23, 32
          %s1560 = smul.addr %s1559, 8
          %s1561 = scalar_lea.hbm %s8, %s1560
          %s1562 = sshll.u32 %s1553, 4
          %s1563 = int_to_ptr.vmem [resolvable:$true] %s1562
          %s1564 = sshll.u32 %s1561, 4
          %s1565 = int_to_ptr.hbm [resolvable:$true] %s1564
          %1570 = dma.vmem_to_hbm [thread:$0]  %s1563, 4096, %s1565, %s1550, 128, 128, 8
        $region56: #{cbam_forward.1} parent=51 // pred_fallthru
          _
      $region52: #{cbam_forward.1} parent=5 // pred_fallthru
        _
      %p1571 = scmp.le.s32.totalorder 2, %s18
      // Predicated region
      $region57: #{cbam_forward.1} parent=5 // pred_check
        %p1572 = pneg %p1571
      $region58: #{cbam_forward.1} parent=5 // pred_check_branch
        %1574 = sbr.rel (%p1572) target = $region60
      $region59: #{cbam_forward.1} parent=5 // pred_region
        %s1575 = ssub.s32 %s18, 2
        // Predicated region
        $region61: #{cbam_forward.1} parent=59 // pred_check
          %p1576 = pneg %p220
        $region62: #{cbam_forward.1} parent=59 // pred_check_branch
          %1578 = sbr.rel (%p1576) target = $region64
        $region63: #{cbam_forward.1} parent=59 // pred_region
          %s1579 = sand.u32 %s205, 1
          %s1580 = scalar_lea.sflag [#allocation4], %s1579
          %s1581 = sand.u32 %s205, 1
          %s1582 = smul.addr %s1581, 256
          %s1583 = scalar_lea.vmem [#allocation3], %s1582
          %1585 = dma.done %s1580, 4096
        $region64: #{cbam_forward.1} parent=59 // pred_fallthru
          _
      $region60: #{cbam_forward.1} parent=5 // pred_fallthru
        _
    $region6: #{cbam_forward.1} parent=1 // loop_footer
      %s22 = sadd.s32 1, %s18
    $region7: #{cbam_forward.1} parent=1 // loop_footer_branch
      %17 = sbr.rel target = $region3
    $region8: #{cbam_forward.1} parent=1 // loop_exit
      _
    %1586 = vsyncpa [#allocation4], 1
    %s1587 = scalar_lea.sflag [#allocation4], 1
    %1588 = vsyncpa %s1587, 1

</llo_original>
